<compile_context>
chip_gen: v6e
topology: v6e:2x2x1
jax: 0.10.0
libtpu: 0.0.40
codegen_flags: <defaults>
</compile_context>

<pallas_src>
import functools

import jax
import jax.numpy as jnp
import numpy as np
from jax.experimental import pallas as pl
from jax.experimental.pallas import tpu as pltpu


def self_attention_kernel(img_ref, w12_ref, w3t_ref, b3_ref, out_ref, *, tb, R):
    """Processes `tb` batch samples per grid step.

    img_ref : (tb*R, D)  region features, rows grouped by sample
    w12_ref : (D, A)     fused attention weight (w1.weight.T @ w2.weight.T)
    w3t_ref : (D, E)     w3.weight.T
    b3_ref  : (1, E)     w3.bias
    out_ref : (tb*A, E)  rows grouped by sample
    """
    A = w12_ref.shape[1]

    x = img_ref[...]                                                     # (tb*R, D)

    # attention scores: ONE fused matmul (ReLU in the reference is `==`, a no-op).
    scores = jnp.dot(x, w12_ref[...], preferred_element_type=jnp.float32)  # (tb*R, A)

    # torch argmax over the region axis (dim=1), first-occurrence tie-break.
    s3 = scores.reshape(tb, R, A)            # leading-dim split (layout-preserving)
    r_iota = jax.lax.broadcasted_iota(jnp.int32, (tb, R, A), 1)
    col_max = jnp.max(s3, axis=1, keepdims=True)                          # (tb, 1, A)
    idx3 = jnp.min(jnp.where(s3 == col_max, r_iota, R), axis=1,
                   keepdims=True)                                         # (tb, 1, A)
    sel3 = (r_iota == idx3).astype(jnp.float32)                           # (tb, R, A)
    sel = sel3.reshape(tb * R, A)            # leading-dim merge (layout-preserving)

    # Consolidated one-hot gather: build the (tb*A, tb*R) block-diagonal mask
    #   mask2d[b*A + a, b'*R + r] = (b == b') * (r == argmax_r scores[b, r, a])
    # then do ONE K = tb*R matmul against the flat x slab (replaces tb tiny batched
    # matmuls).  The attention axis is moved onto the mask rows with a small one-hot
    # nt-matmul (same dot_general pattern as q @ k^T in attention kernels).
    a1 = jax.lax.broadcasted_iota(jnp.int32, (tb, A, A), 1)
    a2 = jax.lax.broadcasted_iota(jnp.int32, (tb, A, A), 2)
    onehot_pa = (a1 == a2).astype(jnp.float32).reshape(tb * A, A)         # (tb*A, A)
    core = jax.lax.dot_general(onehot_pa, sel,
                               (((1,), (1,)), ((), ())),
                               preferred_element_type=jnp.float32)        # (tb*A, tb*R)

    # Block-diagonal batch mask via range compares (no vector int div/mod needed).
    b_iota = jax.lax.broadcasted_iota(jnp.int32, (tb, A, tb * R), 0)      # sample id
    q_iota = jax.lax.broadcasted_iota(jnp.int32, (tb, A, tb * R), 2)      # flat column
    in_block = jnp.logical_and(q_iota >= b_iota * R, q_iota < (b_iota + 1) * R)
    batch_eq = in_block.astype(jnp.float32).reshape(tb * A, tb * R)       # (tb*A, tb*R)

    mask2d = core * batch_eq                                              # exact 0/1
    feats = jnp.dot(mask2d, x, preferred_element_type=jnp.float32)        # (tb*A, D)

    # features = w3(features) + bias.
    feats = jnp.dot(feats, w3t_ref[...],
                    preferred_element_type=jnp.float32) + b3_ref[...]     # (tb*A, E)

    # l2norm over the embedding dim.  Exact reciprocal (VPU divide path -- NOT the EUP
    # approx); l2norm is not a bottleneck and exact math keeps the 1e-5 check robust.
    norm = jnp.sqrt(jnp.sum(feats * feats, axis=-1, keepdims=True)) + 1e-8
    # Note: a lane-dense (tb, A*E) output would avoid 32-lane masked stores, but needs a
    # lane-merging reshape; kept as (tb*A, E) for lowering robustness.
    out_ref[...] = feats * pl.reciprocal(norm, approx=False)


def _pick_tb(B, R):
    """Per-generation batch tile.

    Target ~256-row matmul slabs (fills the 256-wide MXU M dim on v6e/v7x, 2x128 on
    v5e) and a single grid step on single-TensorCore chips; on v7x keep an even grid
    >= 2 so both TensorCores get work under dimension_semantics=("parallel",).
    """
    target = max(1, 256 // max(R, 1))
    try:
        kind = jax.devices()[0].device_kind.lower()
    except Exception:
        kind = ""
    if (("v7" in kind) or ("tpu7" in kind)) and B > 1:
        steps = max(2, 2 * pl.cdiv(pl.cdiv(B, target), 2))   # even, >= 2
        return max(1, pl.cdiv(B, steps))
    return max(1, min(B, target))


def self_attention_forward(images, w1, w2, w3, b3, *, tb=None):
    """images: (B, R, D).  w1:(D//2,D) w2:(A,D//2) w3:(E,D) b3:(E,) -- PyTorch Linear shapes."""
    B, R, D = images.shape
    A = w2.shape[0]
    E = w3.shape[0]

    if tb is None:
        tb = _pick_tb(B, R)
    tb = max(1, min(tb, B))
    # (8,128) rule insurance: if a multi-step grid would produce a non-multiple-of-8
    # second-minor block dim, fall back to one full-block step (always layout-legal).
    if pl.cdiv(B, tb) > 1 and ((tb * A) % 8 or (tb * R) % 8):
        tb = B
    Bp = pl.cdiv(B, tb) * tb
    if Bp != B:
        images = jnp.concatenate(
            [images, jnp.zeros((Bp - B, R, D), images.dtype)], axis=0)

    # Glue (outside the kernel): fuse w1/w2 (ReLU between them is a no-op in the
    # reference), pre-transpose w3, and flatten batch/region so each grid block is
    # tb*R contiguous HBM rows.
    w12 = w1.T @ w2.T               # (D, A)
    w3t = w3.T                      # (D, E)
    b3_2d = b3.reshape(1, E)
    x2d = images.reshape(Bp * R, D)

    out2d = pl.pallas_call(
        functools.partial(self_attention_kernel, tb=tb, R=R),
        out_shape=jax.ShapeDtypeStruct((Bp * A, E), jnp.float32),
        grid_spec=pltpu.PrefetchScalarGridSpec(
            num_scalar_prefetch=0,
            grid=(Bp // tb,),
            in_specs=[
                pl.BlockSpec((tb * R, D), lambda b: (b, 0)),
                # Weights/bias are grid-invariant (index_map always (0, 0)): DMA'd once.
                pl.BlockSpec((D, A), lambda b: (0, 0)),
                pl.BlockSpec((D, E), lambda b: (0, 0)),
                pl.BlockSpec((1, E), lambda b: (0, 0)),
            ],
            out_specs=pl.BlockSpec((tb * A, E), lambda b: (b, 0)),
        ),
        compiler_params=pltpu.CompilerParams(
            dimension_semantics=("parallel",)),
    )(x2d, w12, w3t, b3_2d)

    return out2d.reshape(Bp, A, E)[:B]


def _xavier_uniform(key, shape):
    fan_out, fan_in = shape
    bound = float(np.sqrt(6.0 / (fan_in + fan_out)))
    return jax.random.uniform(key, shape, jnp.float32, -bound, bound)


def _reference(images, w1, w2, w3, b3):
    """Pure-JAX replica of the PyTorch forward (unfused, for verification)."""
    a = images @ w1.T                   # w1(images); ReLU line is a no-op in the reference
    a = a @ w2.T
    idx = jnp.argmax(a, axis=1)                                           # (B, A)
    onehot = jax.nn.one_hot(idx, images.shape[1], dtype=jnp.float32)      # (B, A, R)
    feats = jnp.einsum('bar,brd->bad', onehot, images)
    feats = feats @ w3.T + b3
    norm = jnp.sqrt(jnp.sum(feats ** 2, axis=-1, keepdims=True)) + 1e-8
    return feats / norm


if __name__ == "__main__":
    # Small shapes consistent with the module.  The per-generation tb heuristic picks
    # one 256-row slab on v5e/v6e (grid=1) or two 128-row slabs on v7x (grid=2).
    B, R = 16, 16          # batch, regions
    img_dim = 32           # D
    n_attention = 8        # A
    embed_size = 32        # E

    key = jax.random.PRNGKey(0)
    k_img, k_w1, k_w2, k_w3, k_b3 = jax.random.split(key, 5)

    images = jax.random.normal(k_img, (B, R, img_dim), jnp.float32)

    # Deterministic parameter init (shapes match nn.Linear: (out_features, in_features)).
    w1 = _xavier_uniform(k_w1, (img_dim // 2, img_dim))          # xavier (as in init_weights)
    w2 = jax.random.uniform(k_w2, (n_attention, img_dim // 2), jnp.float32,
                            -1.0 / np.sqrt(img_dim // 2), 1.0 / np.sqrt(img_dim // 2))
    w3 = _xavier_uniform(k_w3, (embed_size, img_dim))            # xavier (as in init_weights)
    b3 = jax.random.uniform(k_b3, (embed_size,), jnp.float32,
                            -1.0 / np.sqrt(img_dim), 1.0 / np.sqrt(img_dim))

    out = self_attention_forward(images, w1, w2, w3, b3)
    out = jax.block_until_ready(out)

    ref = jax.block_until_ready(_reference(images, w1, w2, w3, b3))
    assert out.shape == (B, n_attention, embed_size)
    np.testing.assert_allclose(np.asarray(out), np.asarray(ref), rtol=1e-5, atol=1e-5)

    print("KERNEL_OK")
</pallas_src>

<mosaic_0001>
module attributes {stable_mosaic.version = 11 : i64} {
  func.func @self_attention_kernel(%arg0: i32, %arg1: memref<256x32xf32, #tpu.memory_space<vmem>>, %arg2: memref<32x8xf32, #tpu.memory_space<vmem>>, %arg3: memref<32x32xf32, #tpu.memory_space<vmem>>, %arg4: memref<1x32xf32, #tpu.memory_space<vmem>>, %arg5: memref<128x32xf32, #tpu.memory_space<vmem>>) attributes {dimension_semantics = [#tpu.dimension_semantics<parallel>], iteration_bounds = array<i64: 1>, scalar_prefetch = 0 : i64, scratch_operands = 0 : i64, tpu.core_type = #tpu.core_type<tc>, window_params = [{transform_indices = @transform_0, window_bounds = array<i64: 256, 32>}, {pipeline_mode = #tpu.pipeline_mode<synchronous>, transform_indices = @transform_1, window_bounds = array<i64: 32, 8>}, {pipeline_mode = #tpu.pipeline_mode<synchronous>, transform_indices = @transform_2, window_bounds = array<i64: 32, 32>}, {pipeline_mode = #tpu.pipeline_mode<synchronous>, transform_indices = @transform_3, window_bounds = array<i64: 1, 32>}, {transform_indices = @transform_4, window_bounds = array<i64: 128, 32>}]} {
    %c0 = arith.constant 0 : index
    %c0_0 = arith.constant 0 : index
    %0 = vector.load %arg1[%c0, %c0_0] : memref<256x32xf32, #tpu.memory_space<vmem>>, vector<256x32xf32>
    %c0_1 = arith.constant 0 : index
    %c0_2 = arith.constant 0 : index
    %1 = vector.load %arg2[%c0_1, %c0_2] : memref<32x8xf32, #tpu.memory_space<vmem>>, vector<32x8xf32>
    %cst = arith.constant dense<0.000000e+00> : vector<256x8xf32>
    %2 = tpu.matmul %0, %1, %cst {dimension_numbers = #tpu.dot_dimension_numbers<[1], [0], [0], [1], [0, 0, 1, 1], [], []>} : vector<256x32xf32>, vector<32x8xf32>, vector<256x8xf32> -> vector<256x8xf32>
    %3 = vector.shape_cast %2 : vector<256x8xf32> to vector<16x16x8xf32>
    %4 = tpu.iota {dimensions = array<i32: 1>} : vector<16x16x8xi32>
    %cst_3 = arith.constant dense<0xFF800000> : vector<16x8xf32>
    %5 = vector.multi_reduction <maximumf>, %3, %cst_3 [1] : vector<16x16x8xf32> to vector<16x8xf32>
    %6 = vector.shape_cast %5 : vector<16x8xf32> to vector<16x1x8xf32>
    %7 = vector.broadcast %6 : vector<16x1x8xf32> to vector<16x16x8xf32>
    %8 = arith.cmpf oeq, %3, %7 : vector<16x16x8xf32>
    %c16_i32 = arith.constant 16 : i32
    %9 = vector.broadcast %c16_i32 : i32 to vector<16x16x8xi32>
    %10 = arith.select %8, %4, %9 : vector<16x16x8xi1>, vector<16x16x8xi32>
    %cst_4 = arith.constant dense<2147483647> : vector<16x8xi32>
    %11 = vector.multi_reduction <minsi>, %10, %cst_4 [1] : vector<16x16x8xi32> to vector<16x8xi32>
    %12 = vector.shape_cast %11 : vector<16x8xi32> to vector<16x1x8xi32>
    %13 = vector.broadcast %12 : vector<16x1x8xi32> to vector<16x16x8xi32>
    %14 = arith.cmpi eq, %4, %13 : vector<16x16x8xi32>
    %15 = arith.extui %14 : vector<16x16x8xi1> to vector<16x16x8xi32>
    %16 = arith.sitofp %15 : vector<16x16x8xi32> to vector<16x16x8xf32>
    %17 = vector.shape_cast %16 : vector<16x16x8xf32> to vector<256x8xf32>
    %18 = tpu.iota {dimensions = array<i32: 1>} : vector<16x8x8xi32>
    %19 = tpu.iota {dimensions = array<i32: 2>} : vector<16x8x8xi32>
    %20 = arith.cmpi eq, %18, %19 : vector<16x8x8xi32>
    %21 = arith.extui %20 : vector<16x8x8xi1> to vector<16x8x8xi32>
    %22 = arith.sitofp %21 : vector<16x8x8xi32> to vector<16x8x8xf32>
    %23 = vector.shape_cast %22 : vector<16x8x8xf32> to vector<128x8xf32>
    %cst_5 = arith.constant dense<0.000000e+00> : vector<128x256xf32>
    %24 = tpu.matmul %23, %17, %cst_5 {dimension_numbers = #tpu.dot_dimension_numbers<[1], [1], [0], [0], [0, 0, 1, 0], [], []>} : vector<128x8xf32>, vector<256x8xf32>, vector<128x256xf32> -> vector<128x256xf32>
    %25 = tpu.iota {dimensions = array<i32: 0>} : vector<16x8x256xi32>
    %26 = tpu.iota {dimensions = array<i32: 2>} : vector<16x8x256xi32>
    %c16_i32_6 = arith.constant 16 : i32
    %27 = vector.broadcast %c16_i32_6 : i32 to vector<16x8x256xi32>
    %28 = arith.muli %25, %27 : vector<16x8x256xi32>
    %29 = arith.cmpi sge, %26, %28 : vector<16x8x256xi32>
    %c1_i32 = arith.constant 1 : i32
    %30 = vector.broadcast %c1_i32 : i32 to vector<16x8x256xi32>
    %31 = arith.addi %25, %30 : vector<16x8x256xi32>
    %c16_i32_7 = arith.constant 16 : i32
    %32 = vector.broadcast %c16_i32_7 : i32 to vector<16x8x256xi32>
    %33 = arith.muli %31, %32 : vector<16x8x256xi32>
    %34 = arith.cmpi slt, %26, %33 : vector<16x8x256xi32>
    %35 = arith.andi %29, %34 : vector<16x8x256xi1>
    %36 = arith.extui %35 : vector<16x8x256xi1> to vector<16x8x256xi32>
    %37 = arith.sitofp %36 : vector<16x8x256xi32> to vector<16x8x256xf32>
    %38 = vector.shape_cast %37 : vector<16x8x256xf32> to vector<128x256xf32>
    %39 = arith.mulf %24, %38 : vector<128x256xf32>
    %cst_8 = arith.constant dense<0.000000e+00> : vector<128x32xf32>
    %40 = tpu.matmul %39, %0, %cst_8 {dimension_numbers = #tpu.dot_dimension_numbers<[1], [0], [0], [1], [0, 0, 1, 1], [], []>} : vector<128x256xf32>, vector<256x32xf32>, vector<128x32xf32> -> vector<128x32xf32>
    %c0_9 = arith.constant 0 : index
    %c0_10 = arith.constant 0 : index
    %41 = vector.load %arg3[%c0_9, %c0_10] : memref<32x32xf32, #tpu.memory_space<vmem>>, vector<32x32xf32>
    %cst_11 = arith.constant dense<0.000000e+00> : vector<128x32xf32>
    %42 = tpu.matmul %40, %41, %cst_11 {dimension_numbers = #tpu.dot_dimension_numbers<[1], [0], [0], [1], [0, 0, 1, 1], [], []>} : vector<128x32xf32>, vector<32x32xf32>, vector<128x32xf32> -> vector<128x32xf32>
    %c0_12 = arith.constant 0 : index
    %c0_13 = arith.constant 0 : index
    %43 = vector.load %arg4[%c0_12, %c0_13] : memref<1x32xf32, #tpu.memory_space<vmem>>, vector<1x32xf32>
    %44 = vector.broadcast %43 : vector<1x32xf32> to vector<128x32xf32>
    %45 = arith.addf %42, %44 : vector<128x32xf32>
    %46 = arith.mulf %45, %45 : vector<128x32xf32>
    %cst_14 = arith.constant dense<0.000000e+00> : vector<128xf32>
    %47 = vector.multi_reduction <add>, %46, %cst_14 [1] : vector<128x32xf32> to vector<128xf32>
    %48 = vector.shape_cast %47 : vector<128xf32> to vector<128x1xf32>
    %49 = math.sqrt %48 : vector<128x1xf32>
    %cst_15 = arith.constant 9.99999993E-9 : f32
    %50 = vector.broadcast %cst_15 : f32 to vector<128x1xf32>
    %51 = arith.addf %49, %50 : vector<128x1xf32>
    %52 = tpu.reciprocal %51 : vector<128x1xf32> -> vector<128x1xf32>
    %53 = vector.broadcast %52 : vector<128x1xf32> to vector<128x32xf32>
    %54 = arith.mulf %45, %53 : vector<128x32xf32>
    %c0_16 = arith.constant 0 : index
    %c0_17 = arith.constant 0 : index
    %55 = vector.load %arg5[%c0_16, %c0_17] : memref<128x32xf32, #tpu.memory_space<vmem>>, vector<128x32xf32>
    tpu.vector_store %arg5[%c0_16, %c0_17], %54 {strides = array<i32>} : memref<128x32xf32, #tpu.memory_space<vmem>>, vector<128x32xf32>,
    return
  }
  func.func @transform_0(%arg0: i32) -> (i32, i32) {
    %c0_i32 = arith.constant 0 : i32
    %c0_i32_0 = arith.constant 0 : i32
    return %arg0, %c0_i32 : i32, i32
  }
  func.func @transform_1(%arg0: i32) -> (i32, i32) {
    %c0_i32 = arith.constant 0 : i32
    %c0_i32_0 = arith.constant 0 : i32
    %c0_i32_1 = arith.constant 0 : i32
    return %c0_i32, %c0_i32_0 : i32, i32
  }
  func.func @transform_2(%arg0: i32) -> (i32, i32) {
    %c0_i32 = arith.constant 0 : i32
    %c0_i32_0 = arith.constant 0 : i32
    %c0_i32_1 = arith.constant 0 : i32
    return %c0_i32, %c0_i32_0 : i32, i32
  }
  func.func @transform_3(%arg0: i32) -> (i32, i32) {
    %c0_i32 = arith.constant 0 : i32
    %c0_i32_0 = arith.constant 0 : i32
    %c0_i32_1 = arith.constant 0 : i32
    return %c0_i32, %c0_i32_0 : i32, i32
  }
  func.func @transform_4(%arg0: i32) -> (i32, i32) {
    %c0_i32 = arith.constant 0 : i32
    %c0_i32_0 = arith.constant 0 : i32
    return %arg0, %c0_i32 : i32, i32
  }
}

</mosaic_0001>

<llo_original>
// kernel: tpu_custom_call.1
$region0: #{tpu_custom_call.1}
  #allocation0 [shape = 'u32[]', space=smem, size = 0x4, offset = 0x4, fixed_abs, tag = 'smem constant byte address 0x4 - core index']
  #allocation1 [shape = 'u32[144,128]{1,0:T(1,128)}', space=vmem, size = 0x12000, scoped, tag = 'internal scratch']
  %s0 = inlined_call_operand.vmem [shape: f32[256,32], index: 0, kind: input, shape index: {}]
  %s1 = inlined_call_operand.vmem [shape: f32[32,8], index: 1, kind: input, shape index: {}]
  %s2 = inlined_call_operand.vmem [shape: f32[32,32], index: 2, kind: input, shape index: {}]
  %s3 = inlined_call_operand.vmem [shape: f32[1,32], index: 3, kind: input, shape index: {}]
  %s4 = inlined_call_operand.vmem [shape: f32[128,32], index: 4, kind: output, shape index: {}]
  %s5 = sld [smem:[#allocation0]]
  $region26: #{tpu_custom_call.1} parent=0
    _
  %s7 = ssub.s32 1, %s5
  %s8 = scalar_select 0, %s7, %s5
  // Predicated region
  $region2: #{tpu_custom_call.1} parent=0 // pred_check
    _
  $region3: #{tpu_custom_call.1} parent=0 // pred_check_branch
    %10 = sbr.rel (0) target = $region5
  $region4: #{tpu_custom_call.1} parent=0 // pred_region
    _
  $region5: #{tpu_custom_call.1} parent=0 // pred_fallthru
    _
  // Predicated region
  $region6: #{tpu_custom_call.1} parent=0 // pred_check
    _
  $region7: #{tpu_custom_call.1} parent=0 // pred_check_branch
    %12 = sbr.rel (0) target = $region9
  $region8: #{tpu_custom_call.1} parent=0 // pred_region
    _
  $region9: #{tpu_custom_call.1} parent=0 // pred_fallthru
    _
  // Predicated region
  $region10: #{tpu_custom_call.1} parent=0 // pred_check
    _
  $region11: #{tpu_custom_call.1} parent=0 // pred_check_branch
    %14 = sbr.rel (0) target = $region13
  $region12: #{tpu_custom_call.1} parent=0 // pred_region
    _
  $region13: #{tpu_custom_call.1} parent=0 // pred_fallthru
    _
  // Predicated region
  $region14: #{tpu_custom_call.1} parent=0 // pred_check
    _
  $region15: #{tpu_custom_call.1} parent=0 // pred_check_branch
    %16 = sbr.rel (0) target = $region17
  $region16: #{tpu_custom_call.1} parent=0 // pred_region
    _
  $region17: #{tpu_custom_call.1} parent=0 // pred_fallthru
    _
  %v17 = vld [vmem:[%s0] sm:$0xff]
  %v18 = vld [vmem:[%s0 + $0x8] sm:$0xff]
  %v19 = vld [vmem:[%s0 + $0x10] sm:$0xff]
  %v20 = vld [vmem:[%s0 + $0x18] sm:$0xff]
  %v21 = vld [vmem:[%s0 + $0x20] sm:$0xff]
  %v22 = vld [vmem:[%s0 + $0x28] sm:$0xff]
  %v23 = vld [vmem:[%s0 + $0x30] sm:$0xff]
  %v24 = vld [vmem:[%s0 + $0x38] sm:$0xff]
  %v25 = vld [vmem:[%s0 + $0x40] sm:$0xff]
  %v26 = vld [vmem:[%s0 + $0x48] sm:$0xff]
  %v27 = vld [vmem:[%s0 + $0x50] sm:$0xff]
  %v28 = vld [vmem:[%s0 + $0x58] sm:$0xff]
  %v29 = vld [vmem:[%s0 + $0x60] sm:$0xff]
  %v30 = vld [vmem:[%s0 + $0x68] sm:$0xff]
  %v31 = vld [vmem:[%s0 + $0x70] sm:$0xff]
  %v32 = vld [vmem:[%s0 + $0x78] sm:$0xff]
  %v33 = vld [vmem:[%s0 + $0x80] sm:$0xff]
  %v34 = vld [vmem:[%s0 + $0x88] sm:$0xff]
  %v35 = vld [vmem:[%s0 + $0x90] sm:$0xff]
  %v36 = vld [vmem:[%s0 + $0x98] sm:$0xff]
  %v37 = vld [vmem:[%s0 + $0xa0] sm:$0xff]
  %v38 = vld [vmem:[%s0 + $0xa8] sm:$0xff]
  %v39 = vld [vmem:[%s0 + $0xb0] sm:$0xff]
  %v40 = vld [vmem:[%s0 + $0xb8] sm:$0xff]
  %v41 = vld [vmem:[%s0 + $0xc0] sm:$0xff]
  %v42 = vld [vmem:[%s0 + $0xc8] sm:$0xff]
  %v43 = vld [vmem:[%s0 + $0xd0] sm:$0xff]
  %v44 = vld [vmem:[%s0 + $0xd8] sm:$0xff]
  %v45 = vld [vmem:[%s0 + $0xe0] sm:$0xff]
  %v46 = vld [vmem:[%s0 + $0xe8] sm:$0xff]
  %v47 = vld [vmem:[%s0 + $0xf0] sm:$0xff]
  %v48 = vld [vmem:[%s0 + $0xf8] sm:$0xff]
  %v49 = vld [vmem:[%s1] sm:$0xff]
  %v50 = vld [vmem:[%s1 + $0x8] sm:$0xff]
  %v51 = vld [vmem:[%s1 + $0x10] sm:$0xff]
  %v52 = vld [vmem:[%s1 + $0x18] sm:$0xff]
  %vm53 = vcmask 261120
  %v55 = vsel %vm53, %v17, 0
  %v58 = vsel %vm53, %v18, 0
  %v61 = vsel %vm53, %v19, 0
  %v64 = vsel %vm53, %v20, 0
  %v67 = vsel %vm53, %v21, 0
  %v70 = vsel %vm53, %v22, 0
  %v73 = vsel %vm53, %v23, 0
  %v76 = vsel %vm53, %v24, 0
  %v79 = vsel %vm53, %v25, 0
  %v82 = vsel %vm53, %v26, 0
  %v85 = vsel %vm53, %v27, 0
  %v88 = vsel %vm53, %v28, 0
  %v91 = vsel %vm53, %v29, 0
  %v94 = vsel %vm53, %v30, 0
  %v97 = vsel %vm53, %v31, 0
  %v100 = vsel %vm53, %v32, 0
  %v103 = vsel %vm53, %v33, 0
  %v106 = vsel %vm53, %v34, 0
  %v109 = vsel %vm53, %v35, 0
  %v112 = vsel %vm53, %v36, 0
  %v115 = vsel %vm53, %v37, 0
  %v118 = vsel %vm53, %v38, 0
  %v121 = vsel %vm53, %v39, 0
  %v124 = vsel %vm53, %v40, 0
  %v127 = vsel %vm53, %v41, 0
  %v130 = vsel %vm53, %v42, 0
  %v133 = vsel %vm53, %v43, 0
  %v136 = vsel %vm53, %v44, 0
  %v139 = vsel %vm53, %v45, 0
  %v142 = vsel %vm53, %v46, 0
  %v145 = vsel %vm53, %v47, 0
  %v148 = vsel %vm53, %v48, 0
  %150 = vmatprep.subr.mxu0 0.0
  %151 = vmatpush1.msra.mxu0 0.0
  %152 = vmatprep.subr.mxu0 0.0
  %153 = vmatpush1.msra.mxu0 0.0
  %154 = vmatprep.subr.mxu0 0.0
  %155 = vmatpush1.msra.mxu0 0.0
  %156 = vmatprep.subr.mxu0 0.0
  %157 = vmatpush1.msra.mxu0 0.0
  %158 = vmatprep.subr.mxu0 0.0
  %159 = vmatpush1.msra.mxu0 0.0
  %160 = vmatprep.subr.mxu0 0.0
  %161 = vmatpush1.msra.mxu0 0.0
  %162 = vmatprep.subr.mxu0 0.0
  %163 = vmatpush1.msra.mxu0 0.0
  %164 = vmatprep.subr.mxu0 0.0
  %165 = vmatpush1.msra.mxu0 0.0
  %166 = vmatprep.subr.mxu0 0.0
  %167 = vmatpush1.msra.mxu0 0.0
  %168 = vmatprep.subr.mxu0 0.0
  %169 = vmatpush1.msra.mxu0 0.0
  %170 = vmatprep.subr.mxu0 0.0
  %171 = vmatpush1.msra.mxu0 0.0
  %172 = vmatprep.subr.mxu0 0.0
  %173 = vmatpush1.msra.mxu0 0.0
  %174 = vmatprep.subr.mxu0 0.0
  %175 = vmatpush1.msra.mxu0 %v52
  %176 = vmatprep.subr.mxu0 0.0
  %177 = vmatpush1.msra.mxu0 %v51
  %178 = vmatprep.subr.mxu0 0.0
  %179 = vmatpush1.msra.mxu0 %v50
  %180 = vmatprep.subr.mxu0 0.0
  %181 = vmatpush1.msra.mxu0 %v49
  %182 = vmatprep.subr.mxu0 0.0
  %183 = vmatpush2.msra.mxu0 0.0
  %184 = vmatprep.subr.mxu0 0.0
  %185 = vmatpush2.msra.mxu0 0.0
  %186 = vmatprep.subr.mxu0 0.0
  %187 = vmatpush2.msra.mxu0 0.0
  %188 = vmatprep.subr.mxu0 0.0
  %189 = vmatpush2.msra.mxu0 0.0
  %190 = vmatprep.subr.mxu0 0.0
  %191 = vmatpush2.msra.mxu0 0.0
  %192 = vmatprep.subr.mxu0 0.0
  %193 = vmatpush2.msra.mxu0 0.0
  %194 = vmatprep.subr.mxu0 0.0
  %195 = vmatpush2.msra.mxu0 0.0
  %196 = vmatprep.subr.mxu0 0.0
  %197 = vmatpush2.msra.mxu0 0.0
  %198 = vmatprep.subr.mxu0 0.0
  %199 = vmatpush2.msra.mxu0 0.0
  %200 = vmatprep.subr.mxu0 0.0
  %201 = vmatpush2.msra.mxu0 0.0
  %202 = vmatprep.subr.mxu0 0.0
  %203 = vmatpush2.msra.mxu0 0.0
  %204 = vmatprep.subr.mxu0 0.0
  %205 = vmatpush2.msra.mxu0 0.0
  %206 = vmatprep.subr.mxu0 0.0
  %207 = vmatpush2.msra.mxu0 0.0
  %208 = vmatprep.subr.mxu0 0.0
  %209 = vmatpush2.msra.mxu0 0.0
  %210 = vmatprep.subr.mxu0 0.0
  %211 = vmatpush2.msra.mxu0 0.0
  %212 = vmatprep.subr.mxu0 0.0
  %213 = vmatpush2.msra.mxu0 0.0
  %214 = vmatprep.mubr.f32.mxu0 0.0
  %215 = vmatmul.mubr.f32.gmra.mxu0 %v55
  %v216 = vpop.f32.mrf.mxu0
  %v217 = vadd.f32 0.0, %v216
  %v218 = vpop.f32.mrf.mxu0
  %219 = vmatprep.mubr.f32.mxu0 0.0
  %220 = vmatmul.mubr.f32.gmra.mxu0 %v58
  %v221 = vpop.f32.mrf.mxu0
  %v222 = vadd.f32 0.0, %v221
  %v223 = vpop.f32.mrf.mxu0
  %224 = vmatprep.mubr.f32.mxu0 0.0
  %225 = vmatmul.mubr.f32.gmra.mxu0 %v61
  %v226 = vpop.f32.mrf.mxu0
  %v227 = vadd.f32 0.0, %v226
  %v228 = vpop.f32.mrf.mxu0
  %229 = vmatprep.mubr.f32.mxu0 0.0
  %230 = vmatmul.mubr.f32.gmra.mxu0 %v64
  %v231 = vpop.f32.mrf.mxu0
  %v232 = vadd.f32 0.0, %v231
  %v233 = vpop.f32.mrf.mxu0
  %234 = vmatprep.mubr.f32.mxu0 0.0
  %235 = vmatmul.mubr.f32.gmra.mxu0 %v67
  %v236 = vpop.f32.mrf.mxu0
  %v237 = vadd.f32 0.0, %v236
  %v238 = vpop.f32.mrf.mxu0
  %239 = vmatprep.mubr.f32.mxu0 0.0
  %240 = vmatmul.mubr.f32.gmra.mxu0 %v70
  %v241 = vpop.f32.mrf.mxu0
  %v242 = vadd.f32 0.0, %v241
  %v243 = vpop.f32.mrf.mxu0
  %244 = vmatprep.mubr.f32.mxu0 0.0
  %245 = vmatmul.mubr.f32.gmra.mxu0 %v73
  %v246 = vpop.f32.mrf.mxu0
  %v247 = vadd.f32 0.0, %v246
  %v248 = vpop.f32.mrf.mxu0
  %249 = vmatprep.mubr.f32.mxu0 0.0
  %250 = vmatmul.mubr.f32.gmra.mxu0 %v76
  %v251 = vpop.f32.mrf.mxu0
  %v252 = vadd.f32 0.0, %v251
  %v253 = vpop.f32.mrf.mxu0
  %254 = vmatprep.mubr.f32.mxu0 0.0
  %255 = vmatmul.mubr.f32.gmra.mxu0 %v79
  %v256 = vpop.f32.mrf.mxu0
  %v257 = vadd.f32 0.0, %v256
  %v258 = vpop.f32.mrf.mxu0
  %259 = vmatprep.mubr.f32.mxu0 0.0
  %260 = vmatmul.mubr.f32.gmra.mxu0 %v82
  %v261 = vpop.f32.mrf.mxu0
  %v262 = vadd.f32 0.0, %v261
  %v263 = vpop.f32.mrf.mxu0
  %264 = vmatprep.mubr.f32.mxu0 0.0
  %265 = vmatmul.mubr.f32.gmra.mxu0 %v85
  %v266 = vpop.f32.mrf.mxu0
  %v267 = vadd.f32 0.0, %v266
  %v268 = vpop.f32.mrf.mxu0
  %269 = vmatprep.mubr.f32.mxu0 0.0
  %270 = vmatmul.mubr.f32.gmra.mxu0 %v88
  %v271 = vpop.f32.mrf.mxu0
  %v272 = vadd.f32 0.0, %v271
  %v273 = vpop.f32.mrf.mxu0
  %274 = vmatprep.mubr.f32.mxu0 0.0
  %275 = vmatmul.mubr.f32.gmra.mxu0 %v91
  %v276 = vpop.f32.mrf.mxu0
  %v277 = vadd.f32 0.0, %v276
  %v278 = vpop.f32.mrf.mxu0
  %279 = vmatprep.mubr.f32.mxu0 0.0
  %280 = vmatmul.mubr.f32.gmra.mxu0 %v94
  %v281 = vpop.f32.mrf.mxu0
  %v282 = vadd.f32 0.0, %v281
  %v283 = vpop.f32.mrf.mxu0
  %284 = vmatprep.mubr.f32.mxu0 0.0
  %285 = vmatmul.mubr.f32.gmra.mxu0 %v97
  %v286 = vpop.f32.mrf.mxu0
  %v287 = vadd.f32 0.0, %v286
  %v288 = vpop.f32.mrf.mxu0
  %289 = vmatprep.mubr.f32.mxu0 0.0
  %290 = vmatmul.mubr.f32.gmra.mxu0 %v100
  %v291 = vpop.f32.mrf.mxu0
  %v292 = vadd.f32 0.0, %v291
  %v293 = vpop.f32.mrf.mxu0
  %294 = vmatprep.mubr.f32.mxu0 0.0
  %295 = vmatmul.mubr.f32.gmra.mxu0 %v103
  %v296 = vpop.f32.mrf.mxu0
  %v297 = vadd.f32 0.0, %v296
  %v298 = vpop.f32.mrf.mxu0
  %299 = vmatprep.mubr.f32.mxu0 0.0
  %300 = vmatmul.mubr.f32.gmra.mxu0 %v106
  %v301 = vpop.f32.mrf.mxu0
  %v302 = vadd.f32 0.0, %v301
  %v303 = vpop.f32.mrf.mxu0
  %304 = vmatprep.mubr.f32.mxu0 0.0
  %305 = vmatmul.mubr.f32.gmra.mxu0 %v109
  %v306 = vpop.f32.mrf.mxu0
  %v307 = vadd.f32 0.0, %v306
  %v308 = vpop.f32.mrf.mxu0
  %309 = vmatprep.mubr.f32.mxu0 0.0
  %310 = vmatmul.mubr.f32.gmra.mxu0 %v112
  %v311 = vpop.f32.mrf.mxu0
  %v312 = vadd.f32 0.0, %v311
  %v313 = vpop.f32.mrf.mxu0
  %314 = vmatprep.mubr.f32.mxu0 0.0
  %315 = vmatmul.mubr.f32.gmra.mxu0 %v115
  %v316 = vpop.f32.mrf.mxu0
  %v317 = vadd.f32 0.0, %v316
  %v318 = vpop.f32.mrf.mxu0
  %319 = vmatprep.mubr.f32.mxu0 0.0
  %320 = vmatmul.mubr.f32.gmra.mxu0 %v118
  %v321 = vpop.f32.mrf.mxu0
  %v322 = vadd.f32 0.0, %v321
  %v323 = vpop.f32.mrf.mxu0
  %324 = vmatprep.mubr.f32.mxu0 0.0
  %325 = vmatmul.mubr.f32.gmra.mxu0 %v121
  %v326 = vpop.f32.mrf.mxu0
  %v327 = vadd.f32 0.0, %v326
  %v328 = vpop.f32.mrf.mxu0
  %329 = vmatprep.mubr.f32.mxu0 0.0
  %330 = vmatmul.mubr.f32.gmra.mxu0 %v124
  %v331 = vpop.f32.mrf.mxu0
  %v332 = vadd.f32 0.0, %v331
  %v333 = vpop.f32.mrf.mxu0
  %334 = vmatprep.mubr.f32.mxu0 0.0
  %335 = vmatmul.mubr.f32.gmra.mxu0 %v127
  %v336 = vpop.f32.mrf.mxu0
  %v337 = vadd.f32 0.0, %v336
  %v338 = vpop.f32.mrf.mxu0
  %339 = vmatprep.mubr.f32.mxu0 0.0
  %340 = vmatmul.mubr.f32.gmra.mxu0 %v130
  %v341 = vpop.f32.mrf.mxu0
  %v342 = vadd.f32 0.0, %v341
  %v343 = vpop.f32.mrf.mxu0
  %344 = vmatprep.mubr.f32.mxu0 0.0
  %345 = vmatmul.mubr.f32.gmra.mxu0 %v133
  %v346 = vpop.f32.mrf.mxu0
  %v347 = vadd.f32 0.0, %v346
  %v348 = vpop.f32.mrf.mxu0
  %349 = vmatprep.mubr.f32.mxu0 0.0
  %350 = vmatmul.mubr.f32.gmra.mxu0 %v136
  %v351 = vpop.f32.mrf.mxu0
  %v352 = vadd.f32 0.0, %v351
  %v353 = vpop.f32.mrf.mxu0
  %354 = vmatprep.mubr.f32.mxu0 0.0
  %355 = vmatmul.mubr.f32.gmra.mxu0 %v139
  %v356 = vpop.f32.mrf.mxu0
  %v357 = vadd.f32 0.0, %v356
  %v358 = vpop.f32.mrf.mxu0
  %359 = vmatprep.mubr.f32.mxu0 0.0
  %360 = vmatmul.mubr.f32.gmra.mxu0 %v142
  %v361 = vpop.f32.mrf.mxu0
  %v362 = vadd.f32 0.0, %v361
  %v363 = vpop.f32.mrf.mxu0
  %364 = vmatprep.mubr.f32.mxu0 0.0
  %365 = vmatmul.mubr.f32.gmra.mxu0 %v145
  %v366 = vpop.f32.mrf.mxu0
  %v367 = vadd.f32 0.0, %v366
  %v368 = vpop.f32.mrf.mxu0
  %369 = vmatprep.mubr.f32.mxu0 0.0
  %370 = vmatmul.mubr.f32.gmra.mxu0 %v148
  %v371 = vpop.f32.mrf.mxu0
  %v372 = vadd.f32 0.0, %v371
  %v373 = vpop.f32.mrf.mxu0
  %374 = vdwg.mxu0
  %v375 = vlaneseq
  %v376 = vshrl.u32 %v375, 7
  %v377 = vadd.s32 %v376, 8
  %vm378 = vcmask 64512
  %v379 = vsel %vm378, %v217, -inf
  %v380 = vsel %vm378, %v222, -inf
  %v381 = vmax.f32 %v379, %v380
  %v382 = vrot.slane %v381, 4
  %v383 = vmax.f32 %v381, %v382
  %v384 = vrot.slane %v383, 2
  %v385 = vmax.f32 %v383, %v384
  %v386 = vrot.slane %v385, 1
  %v387 = vmax.f32 %v385, %v386
  %v388 = vsel %vm378, %v227, -inf
  %v389 = vsel %vm378, %v232, -inf
  %v390 = vmax.f32 %v388, %v389
  %v391 = vrot.slane %v390, 4
  %v392 = vmax.f32 %v390, %v391
  %v393 = vrot.slane %v392, 2
  %v394 = vmax.f32 %v392, %v393
  %v395 = vrot.slane %v394, 1
  %v396 = vmax.f32 %v394, %v395
  %v397 = vsel %vm378, %v237, -inf
  %v398 = vsel %vm378, %v242, -inf
  %v399 = vmax.f32 %v397, %v398
  %v400 = vrot.slane %v399, 4
  %v401 = vmax.f32 %v399, %v400
  %v402 = vrot.slane %v401, 2
  %v403 = vmax.f32 %v401, %v402
  %v404 = vrot.slane %v403, 1
  %v405 = vmax.f32 %v403, %v404
  %v406 = vsel %vm378, %v247, -inf
  %v407 = vsel %vm378, %v252, -inf
  %v408 = vmax.f32 %v406, %v407
  %v409 = vrot.slane %v408, 4
  %v410 = vmax.f32 %v408, %v409
  %v411 = vrot.slane %v410, 2
  %v412 = vmax.f32 %v410, %v411
  %v413 = vrot.slane %v412, 1
  %v414 = vmax.f32 %v412, %v413
  %v415 = vsel %vm378, %v257, -inf
  %v416 = vsel %vm378, %v262, -inf
  %v417 = vmax.f32 %v415, %v416
  %v418 = vrot.slane %v417, 4
  %v419 = vmax.f32 %v417, %v418
  %v420 = vrot.slane %v419, 2
  %v421 = vmax.f32 %v419, %v420
  %v422 = vrot.slane %v421, 1
  %v423 = vmax.f32 %v421, %v422
  %v424 = vsel %vm378, %v267, -inf
  %v425 = vsel %vm378, %v272, -inf
  %v426 = vmax.f32 %v424, %v425
  %v427 = vrot.slane %v426, 4
  %v428 = vmax.f32 %v426, %v427
  %v429 = vrot.slane %v428, 2
  %v430 = vmax.f32 %v428, %v429
  %v431 = vrot.slane %v430, 1
  %v432 = vmax.f32 %v430, %v431
  %v433 = vsel %vm378, %v277, -inf
  %v434 = vsel %vm378, %v282, -inf
  %v435 = vmax.f32 %v433, %v434
  %v436 = vrot.slane %v435, 4
  %v437 = vmax.f32 %v435, %v436
  %v438 = vrot.slane %v437, 2
  %v439 = vmax.f32 %v437, %v438
  %v440 = vrot.slane %v439, 1
  %v441 = vmax.f32 %v439, %v440
  %v442 = vsel %vm378, %v287, -inf
  %v443 = vsel %vm378, %v292, -inf
  %v444 = vmax.f32 %v442, %v443
  %v445 = vrot.slane %v444, 4
  %v446 = vmax.f32 %v444, %v445
  %v447 = vrot.slane %v446, 2
  %v448 = vmax.f32 %v446, %v447
  %v449 = vrot.slane %v448, 1
  %v450 = vmax.f32 %v448, %v449
  %v451 = vsel %vm378, %v297, -inf
  %v452 = vsel %vm378, %v302, -inf
  %v453 = vmax.f32 %v451, %v452
  %v454 = vrot.slane %v453, 4
  %v455 = vmax.f32 %v453, %v454
  %v456 = vrot.slane %v455, 2
  %v457 = vmax.f32 %v455, %v456
  %v458 = vrot.slane %v457, 1
  %v459 = vmax.f32 %v457, %v458
  %v460 = vsel %vm378, %v307, -inf
  %v461 = vsel %vm378, %v312, -inf
  %v462 = vmax.f32 %v460, %v461
  %v463 = vrot.slane %v462, 4
  %v464 = vmax.f32 %v462, %v463
  %v465 = vrot.slane %v464, 2
  %v466 = vmax.f32 %v464, %v465
  %v467 = vrot.slane %v466, 1
  %v468 = vmax.f32 %v466, %v467
  %v469 = vsel %vm378, %v317, -inf
  %v470 = vsel %vm378, %v322, -inf
  %v471 = vmax.f32 %v469, %v470
  %v472 = vrot.slane %v471, 4
  %v473 = vmax.f32 %v471, %v472
  %v474 = vrot.slane %v473, 2
  %v475 = vmax.f32 %v473, %v474
  %v476 = vrot.slane %v475, 1
  %v477 = vmax.f32 %v475, %v476
  %v478 = vsel %vm378, %v327, -inf
  %v479 = vsel %vm378, %v332, -inf
  %v480 = vmax.f32 %v478, %v479
  %v481 = vrot.slane %v480, 4
  %v482 = vmax.f32 %v480, %v481
  %v483 = vrot.slane %v482, 2
  %v484 = vmax.f32 %v482, %v483
  %v485 = vrot.slane %v484, 1
  %v486 = vmax.f32 %v484, %v485
  %v487 = vsel %vm378, %v337, -inf
  %v488 = vsel %vm378, %v342, -inf
  %v489 = vmax.f32 %v487, %v488
  %v490 = vrot.slane %v489, 4
  %v491 = vmax.f32 %v489, %v490
  %v492 = vrot.slane %v491, 2
  %v493 = vmax.f32 %v491, %v492
  %v494 = vrot.slane %v493, 1
  %v495 = vmax.f32 %v493, %v494
  %v496 = vsel %vm378, %v347, -inf
  %v497 = vsel %vm378, %v352, -inf
  %v498 = vmax.f32 %v496, %v497
  %v499 = vrot.slane %v498, 4
  %v500 = vmax.f32 %v498, %v499
  %v501 = vrot.slane %v500, 2
  %v502 = vmax.f32 %v500, %v501
  %v503 = vrot.slane %v502, 1
  %v504 = vmax.f32 %v502, %v503
  %v505 = vsel %vm378, %v357, -inf
  %v506 = vsel %vm378, %v362, -inf
  %v507 = vmax.f32 %v505, %v506
  %v508 = vrot.slane %v507, 4
  %v509 = vmax.f32 %v507, %v508
  %v510 = vrot.slane %v509, 2
  %v511 = vmax.f32 %v509, %v510
  %v512 = vrot.slane %v511, 1
  %v513 = vmax.f32 %v511, %v512
  %v514 = vsel %vm378, %v367, -inf
  %v515 = vsel %vm378, %v372, -inf
  %v516 = vmax.f32 %v514, %v515
  %v517 = vrot.slane %v516, 4
  %v518 = vmax.f32 %v516, %v517
  %v519 = vrot.slane %v518, 2
  %v520 = vmax.f32 %v518, %v519
  %v521 = vrot.slane %v520, 1
  %v522 = vmax.f32 %v520, %v521
  %vm523 = vcmp.eq.f32.partialorder %v217, %v387
  %vm524 = vcmp.eq.f32.partialorder %v222, %v387
  %vm525 = vcmp.eq.f32.partialorder %v227, %v396
  %vm526 = vcmp.eq.f32.partialorder %v232, %v396
  %vm527 = vcmp.eq.f32.partialorder %v237, %v405
  %vm528 = vcmp.eq.f32.partialorder %v242, %v405
  %vm529 = vcmp.eq.f32.partialorder %v247, %v414
  %vm530 = vcmp.eq.f32.partialorder %v252, %v414
  %vm531 = vcmp.eq.f32.partialorder %v257, %v423
  %vm532 = vcmp.eq.f32.partialorder %v262, %v423
  %vm533 = vcmp.eq.f32.partialorder %v267, %v432
  %vm534 = vcmp.eq.f32.partialorder %v272, %v432
  %vm535 = vcmp.eq.f32.partialorder %v277, %v441
  %vm536 = vcmp.eq.f32.partialorder %v282, %v441
  %vm537 = vcmp.eq.f32.partialorder %v287, %v450
  %vm538 = vcmp.eq.f32.partialorder %v292, %v450
  %vm539 = vcmp.eq.f32.partialorder %v297, %v459
  %vm540 = vcmp.eq.f32.partialorder %v302, %v459
  %vm541 = vcmp.eq.f32.partialorder %v307, %v468
  %vm542 = vcmp.eq.f32.partialorder %v312, %v468
  %vm543 = vcmp.eq.f32.partialorder %v317, %v477
  %vm544 = vcmp.eq.f32.partialorder %v322, %v477
  %vm545 = vcmp.eq.f32.partialorder %v327, %v486
  %vm546 = vcmp.eq.f32.partialorder %v332, %v486
  %vm547 = vcmp.eq.f32.partialorder %v337, %v495
  %vm548 = vcmp.eq.f32.partialorder %v342, %v495
  %vm549 = vcmp.eq.f32.partialorder %v347, %v504
  %vm550 = vcmp.eq.f32.partialorder %v352, %v504
  %vm551 = vcmp.eq.f32.partialorder %v357, %v513
  %vm552 = vcmp.eq.f32.partialorder %v362, %v513
  %vm553 = vcmp.eq.f32.partialorder %v367, %v522
  %vm554 = vcmp.eq.f32.partialorder %v372, %v522
  %v555 = vsel %vm523, %v376, 16
  %v556 = vsel %vm524, %v377, 16
  %v557 = vsel %vm525, %v376, 16
  %v558 = vsel %vm526, %v377, 16
  %v559 = vsel %vm527, %v376, 16
  %v560 = vsel %vm528, %v377, 16
  %v561 = vsel %vm529, %v376, 16
  %v562 = vsel %vm530, %v377, 16
  %v563 = vsel %vm531, %v376, 16
  %v564 = vsel %vm532, %v377, 16
  %v565 = vsel %vm533, %v376, 16
  %v566 = vsel %vm534, %v377, 16
  %v567 = vsel %vm535, %v376, 16
  %v568 = vsel %vm536, %v377, 16
  %v569 = vsel %vm537, %v376, 16
  %v570 = vsel %vm538, %v377, 16
  %v571 = vsel %vm539, %v376, 16
  %v572 = vsel %vm540, %v377, 16
  %v573 = vsel %vm541, %v376, 16
  %v574 = vsel %vm542, %v377, 16
  %v575 = vsel %vm543, %v376, 16
  %v576 = vsel %vm544, %v377, 16
  %v577 = vsel %vm545, %v376, 16
  %v578 = vsel %vm546, %v377, 16
  %v579 = vsel %vm547, %v376, 16
  %v580 = vsel %vm548, %v377, 16
  %v581 = vsel %vm549, %v376, 16
  %v582 = vsel %vm550, %v377, 16
  %v583 = vsel %vm551, %v376, 16
  %v584 = vsel %vm552, %v377, 16
  %v585 = vsel %vm553, %v376, 16
  %v586 = vsel %vm554, %v377, 16
  %v587 = vsel %vm378, %v555, 2147483647
  %v588 = vsel %vm378, %v556, 2147483647
  %vm589 = vcmp.lt.s32.totalorder %v587, %v588
  %v590 = vsel %vm589, %v587, %v588
  %v591 = vrot.slane %v590, 4
  %vm592 = vcmp.lt.s32.totalorder %v590, %v591
  %v593 = vsel %vm592, %v590, %v591
  %v594 = vrot.slane %v593, 2
  %vm595 = vcmp.lt.s32.totalorder %v593, %v594
  %v596 = vsel %vm595, %v593, %v594
  %v597 = vrot.slane %v596, 1
  %vm598 = vcmp.lt.s32.totalorder %v596, %v597
  %v599 = vsel %vm598, %v596, %v597
  %v600 = vsel %vm378, %v557, 2147483647
  %v601 = vsel %vm378, %v558, 2147483647
  %vm602 = vcmp.lt.s32.totalorder %v600, %v601
  %v603 = vsel %vm602, %v600, %v601
  %v604 = vrot.slane %v603, 4
  %vm605 = vcmp.lt.s32.totalorder %v603, %v604
  %v606 = vsel %vm605, %v603, %v604
  %v607 = vrot.slane %v606, 2
  %vm608 = vcmp.lt.s32.totalorder %v606, %v607
  %v609 = vsel %vm608, %v606, %v607
  %v610 = vrot.slane %v609, 1
  %vm611 = vcmp.lt.s32.totalorder %v609, %v610
  %v612 = vsel %vm611, %v609, %v610
  %v613 = vsel %vm378, %v559, 2147483647
  %v614 = vsel %vm378, %v560, 2147483647
  %vm615 = vcmp.lt.s32.totalorder %v613, %v614
  %v616 = vsel %vm615, %v613, %v614
  %v617 = vrot.slane %v616, 4
  %vm618 = vcmp.lt.s32.totalorder %v616, %v617
  %v619 = vsel %vm618, %v616, %v617
  %v620 = vrot.slane %v619, 2
  %vm621 = vcmp.lt.s32.totalorder %v619, %v620
  %v622 = vsel %vm621, %v619, %v620
  %v623 = vrot.slane %v622, 1
  %vm624 = vcmp.lt.s32.totalorder %v622, %v623
  %v625 = vsel %vm624, %v622, %v623
  %v626 = vsel %vm378, %v561, 2147483647
  %v627 = vsel %vm378, %v562, 2147483647
  %vm628 = vcmp.lt.s32.totalorder %v626, %v627
  %v629 = vsel %vm628, %v626, %v627
  %v630 = vrot.slane %v629, 4
  %vm631 = vcmp.lt.s32.totalorder %v629, %v630
  %v632 = vsel %vm631, %v629, %v630
  %v633 = vrot.slane %v632, 2
  %vm634 = vcmp.lt.s32.totalorder %v632, %v633
  %v635 = vsel %vm634, %v632, %v633
  %v636 = vrot.slane %v635, 1
  %vm637 = vcmp.lt.s32.totalorder %v635, %v636
  %v638 = vsel %vm637, %v635, %v636
  %v639 = vsel %vm378, %v563, 2147483647
  %v640 = vsel %vm378, %v564, 2147483647
  %vm641 = vcmp.lt.s32.totalorder %v639, %v640
  %v642 = vsel %vm641, %v639, %v640
  %v643 = vrot.slane %v642, 4
  %vm644 = vcmp.lt.s32.totalorder %v642, %v643
  %v645 = vsel %vm644, %v642, %v643
  %v646 = vrot.slane %v645, 2
  %vm647 = vcmp.lt.s32.totalorder %v645, %v646
  %v648 = vsel %vm647, %v645, %v646
  %v649 = vrot.slane %v648, 1
  %vm650 = vcmp.lt.s32.totalorder %v648, %v649
  %v651 = vsel %vm650, %v648, %v649
  %v652 = vsel %vm378, %v565, 2147483647
  %v653 = vsel %vm378, %v566, 2147483647
  %vm654 = vcmp.lt.s32.totalorder %v652, %v653
  %v655 = vsel %vm654, %v652, %v653
  %v656 = vrot.slane %v655, 4
  %vm657 = vcmp.lt.s32.totalorder %v655, %v656
  %v658 = vsel %vm657, %v655, %v656
  %v659 = vrot.slane %v658, 2
  %vm660 = vcmp.lt.s32.totalorder %v658, %v659
  %v661 = vsel %vm660, %v658, %v659
  %v662 = vrot.slane %v661, 1
  %vm663 = vcmp.lt.s32.totalorder %v661, %v662
  %v664 = vsel %vm663, %v661, %v662
  %v665 = vsel %vm378, %v567, 2147483647
  %v666 = vsel %vm378, %v568, 2147483647
  %vm667 = vcmp.lt.s32.totalorder %v665, %v666
  %v668 = vsel %vm667, %v665, %v666
  %v669 = vrot.slane %v668, 4
  %vm670 = vcmp.lt.s32.totalorder %v668, %v669
  %v671 = vsel %vm670, %v668, %v669
  %v672 = vrot.slane %v671, 2
  %vm673 = vcmp.lt.s32.totalorder %v671, %v672
  %v674 = vsel %vm673, %v671, %v672
  %v675 = vrot.slane %v674, 1
  %vm676 = vcmp.lt.s32.totalorder %v674, %v675
  %v677 = vsel %vm676, %v674, %v675
  %v678 = vsel %vm378, %v569, 2147483647
  %v679 = vsel %vm378, %v570, 2147483647
  %vm680 = vcmp.lt.s32.totalorder %v678, %v679
  %v681 = vsel %vm680, %v678, %v679
  %v682 = vrot.slane %v681, 4
  %vm683 = vcmp.lt.s32.totalorder %v681, %v682
  %v684 = vsel %vm683, %v681, %v682
  %v685 = vrot.slane %v684, 2
  %vm686 = vcmp.lt.s32.totalorder %v684, %v685
  %v687 = vsel %vm686, %v684, %v685
  %v688 = vrot.slane %v687, 1
  %vm689 = vcmp.lt.s32.totalorder %v687, %v688
  %v690 = vsel %vm689, %v687, %v688
  %v691 = vsel %vm378, %v571, 2147483647
  %v692 = vsel %vm378, %v572, 2147483647
  %vm693 = vcmp.lt.s32.totalorder %v691, %v692
  %v694 = vsel %vm693, %v691, %v692
  %v695 = vrot.slane %v694, 4
  %vm696 = vcmp.lt.s32.totalorder %v694, %v695
  %v697 = vsel %vm696, %v694, %v695
  %v698 = vrot.slane %v697, 2
  %vm699 = vcmp.lt.s32.totalorder %v697, %v698
  %v700 = vsel %vm699, %v697, %v698
  %v701 = vrot.slane %v700, 1
  %vm702 = vcmp.lt.s32.totalorder %v700, %v701
  %v703 = vsel %vm702, %v700, %v701
  %v704 = vsel %vm378, %v573, 2147483647
  %v705 = vsel %vm378, %v574, 2147483647
  %vm706 = vcmp.lt.s32.totalorder %v704, %v705
  %v707 = vsel %vm706, %v704, %v705
  %v708 = vrot.slane %v707, 4
  %vm709 = vcmp.lt.s32.totalorder %v707, %v708
  %v710 = vsel %vm709, %v707, %v708
  %v711 = vrot.slane %v710, 2
  %vm712 = vcmp.lt.s32.totalorder %v710, %v711
  %v713 = vsel %vm712, %v710, %v711
  %v714 = vrot.slane %v713, 1
  %vm715 = vcmp.lt.s32.totalorder %v713, %v714
  %v716 = vsel %vm715, %v713, %v714
  %v717 = vsel %vm378, %v575, 2147483647
  %v718 = vsel %vm378, %v576, 2147483647
  %vm719 = vcmp.lt.s32.totalorder %v717, %v718
  %v720 = vsel %vm719, %v717, %v718
  %v721 = vrot.slane %v720, 4
  %vm722 = vcmp.lt.s32.totalorder %v720, %v721
  %v723 = vsel %vm722, %v720, %v721
  %v724 = vrot.slane %v723, 2
  %vm725 = vcmp.lt.s32.totalorder %v723, %v724
  %v726 = vsel %vm725, %v723, %v724
  %v727 = vrot.slane %v726, 1
  %vm728 = vcmp.lt.s32.totalorder %v726, %v727
  %v729 = vsel %vm728, %v726, %v727
  %v730 = vsel %vm378, %v577, 2147483647
  %v731 = vsel %vm378, %v578, 2147483647
  %vm732 = vcmp.lt.s32.totalorder %v730, %v731
  %v733 = vsel %vm732, %v730, %v731
  %v734 = vrot.slane %v733, 4
  %vm735 = vcmp.lt.s32.totalorder %v733, %v734
  %v736 = vsel %vm735, %v733, %v734
  %v737 = vrot.slane %v736, 2
  %vm738 = vcmp.lt.s32.totalorder %v736, %v737
  %v739 = vsel %vm738, %v736, %v737
  %v740 = vrot.slane %v739, 1
  %vm741 = vcmp.lt.s32.totalorder %v739, %v740
  %v742 = vsel %vm741, %v739, %v740
  %v743 = vsel %vm378, %v579, 2147483647
  %v744 = vsel %vm378, %v580, 2147483647
  %vm745 = vcmp.lt.s32.totalorder %v743, %v744
  %v746 = vsel %vm745, %v743, %v744
  %v747 = vrot.slane %v746, 4
  %vm748 = vcmp.lt.s32.totalorder %v746, %v747
  %v749 = vsel %vm748, %v746, %v747
  %v750 = vrot.slane %v749, 2
  %vm751 = vcmp.lt.s32.totalorder %v749, %v750
  %v752 = vsel %vm751, %v749, %v750
  %v753 = vrot.slane %v752, 1
  %vm754 = vcmp.lt.s32.totalorder %v752, %v753
  %v755 = vsel %vm754, %v752, %v753
  %v756 = vsel %vm378, %v581, 2147483647
  %v757 = vsel %vm378, %v582, 2147483647
  %vm758 = vcmp.lt.s32.totalorder %v756, %v757
  %v759 = vsel %vm758, %v756, %v757
  %v760 = vrot.slane %v759, 4
  %vm761 = vcmp.lt.s32.totalorder %v759, %v760
  %v762 = vsel %vm761, %v759, %v760
  %v763 = vrot.slane %v762, 2
  %vm764 = vcmp.lt.s32.totalorder %v762, %v763
  %v765 = vsel %vm764, %v762, %v763
  %v766 = vrot.slane %v765, 1
  %vm767 = vcmp.lt.s32.totalorder %v765, %v766
  %v768 = vsel %vm767, %v765, %v766
  %v769 = vsel %vm378, %v583, 2147483647
  %v770 = vsel %vm378, %v584, 2147483647
  %vm771 = vcmp.lt.s32.totalorder %v769, %v770
  %v772 = vsel %vm771, %v769, %v770
  %v773 = vrot.slane %v772, 4
  %vm774 = vcmp.lt.s32.totalorder %v772, %v773
  %v775 = vsel %vm774, %v772, %v773
  %v776 = vrot.slane %v775, 2
  %vm777 = vcmp.lt.s32.totalorder %v775, %v776
  %v778 = vsel %vm777, %v775, %v776
  %v779 = vrot.slane %v778, 1
  %vm780 = vcmp.lt.s32.totalorder %v778, %v779
  %v781 = vsel %vm780, %v778, %v779
  %v782 = vsel %vm378, %v585, 2147483647
  %v783 = vsel %vm378, %v586, 2147483647
  %vm784 = vcmp.lt.s32.totalorder %v782, %v783
  %v785 = vsel %vm784, %v782, %v783
  %v786 = vrot.slane %v785, 4
  %vm787 = vcmp.lt.s32.totalorder %v785, %v786
  %v788 = vsel %vm787, %v785, %v786
  %v789 = vrot.slane %v788, 2
  %vm790 = vcmp.lt.s32.totalorder %v788, %v789
  %v791 = vsel %vm790, %v788, %v789
  %v792 = vrot.slane %v791, 1
  %vm793 = vcmp.lt.s32.totalorder %v791, %v792
  %v794 = vsel %vm793, %v791, %v792
  %vm795 = vcmp.eq.s32.totalorder %v376, %v599
  %vm796 = vcmp.eq.s32.totalorder %v377, %v599
  %vm797 = vcmp.eq.s32.totalorder %v376, %v612
  %vm798 = vcmp.eq.s32.totalorder %v377, %v612
  %vm799 = vcmp.eq.s32.totalorder %v376, %v625
  %vm800 = vcmp.eq.s32.totalorder %v377, %v625
  %vm801 = vcmp.eq.s32.totalorder %v376, %v638
  %vm802 = vcmp.eq.s32.totalorder %v377, %v638
  %vm803 = vcmp.eq.s32.totalorder %v376, %v651
  %vm804 = vcmp.eq.s32.totalorder %v377, %v651
  %vm805 = vcmp.eq.s32.totalorder %v376, %v664
  %vm806 = vcmp.eq.s32.totalorder %v377, %v664
  %vm807 = vcmp.eq.s32.totalorder %v376, %v677
  %vm808 = vcmp.eq.s32.totalorder %v377, %v677
  %vm809 = vcmp.eq.s32.totalorder %v376, %v690
  %vm810 = vcmp.eq.s32.totalorder %v377, %v690
  %vm811 = vcmp.eq.s32.totalorder %v376, %v703
  %vm812 = vcmp.eq.s32.totalorder %v377, %v703
  %vm813 = vcmp.eq.s32.totalorder %v376, %v716
  %vm814 = vcmp.eq.s32.totalorder %v377, %v716
  %vm815 = vcmp.eq.s32.totalorder %v376, %v729
  %vm816 = vcmp.eq.s32.totalorder %v377, %v729
  %vm817 = vcmp.eq.s32.totalorder %v376, %v742
  %vm818 = vcmp.eq.s32.totalorder %v377, %v742
  %vm819 = vcmp.eq.s32.totalorder %v376, %v755
  %vm820 = vcmp.eq.s32.totalorder %v377, %v755
  %vm821 = vcmp.eq.s32.totalorder %v376, %v768
  %vm822 = vcmp.eq.s32.totalorder %v377, %v768
  %vm823 = vcmp.eq.s32.totalorder %v376, %v781
  %vm824 = vcmp.eq.s32.totalorder %v377, %v781
  %vm825 = vcmp.eq.s32.totalorder %v376, %v794
  %vm826 = vcmp.eq.s32.totalorder %v377, %v794
  %v827 = vsel %vm795, 1, 0
  %v828 = vsel %vm796, 1, 0
  %v829 = vsel %vm797, 1, 0
  %v830 = vsel %vm798, 1, 0
  %v831 = vsel %vm799, 1, 0
  %v832 = vsel %vm800, 1, 0
  %v833 = vsel %vm801, 1, 0
  %v834 = vsel %vm802, 1, 0
  %v835 = vsel %vm803, 1, 0
  %v836 = vsel %vm804, 1, 0
  %v837 = vsel %vm805, 1, 0
  %v838 = vsel %vm806, 1, 0
  %v839 = vsel %vm807, 1, 0
  %v840 = vsel %vm808, 1, 0
  %v841 = vsel %vm809, 1, 0
  %v842 = vsel %vm810, 1, 0
  %v843 = vsel %vm811, 1, 0
  %v844 = vsel %vm812, 1, 0
  %v845 = vsel %vm813, 1, 0
  %v846 = vsel %vm814, 1, 0
  %v847 = vsel %vm815, 1, 0
  %v848 = vsel %vm816, 1, 0
  %v849 = vsel %vm817, 1, 0
  %v850 = vsel %vm818, 1, 0
  %v851 = vsel %vm819, 1, 0
  %v852 = vsel %vm820, 1, 0
  %v853 = vsel %vm821, 1, 0
  %v854 = vsel %vm822, 1, 0
  %v855 = vsel %vm823, 1, 0
  %v856 = vsel %vm824, 1, 0
  %v857 = vsel %vm825, 1, 0
  %v858 = vsel %vm826, 1, 0
  %v859 = vcvt.s32.f32 %v827
  %v860 = vcvt.s32.f32 %v828
  %v861 = vcvt.s32.f32 %v829
  %v862 = vcvt.s32.f32 %v830
  %v863 = vcvt.s32.f32 %v831
  %v864 = vcvt.s32.f32 %v832
  %v865 = vcvt.s32.f32 %v833
  %v866 = vcvt.s32.f32 %v834
  %v867 = vcvt.s32.f32 %v835
  %v868 = vcvt.s32.f32 %v836
  %v869 = vcvt.s32.f32 %v837
  %v870 = vcvt.s32.f32 %v838
  %v871 = vcvt.s32.f32 %v839
  %v872 = vcvt.s32.f32 %v840
  %v873 = vcvt.s32.f32 %v841
  %v874 = vcvt.s32.f32 %v842
  %v875 = vcvt.s32.f32 %v843
  %v876 = vcvt.s32.f32 %v844
  %v877 = vcvt.s32.f32 %v845
  %v878 = vcvt.s32.f32 %v846
  %v879 = vcvt.s32.f32 %v847
  %v880 = vcvt.s32.f32 %v848
  %v881 = vcvt.s32.f32 %v849
  %v882 = vcvt.s32.f32 %v850
  %v883 = vcvt.s32.f32 %v851
  %v884 = vcvt.s32.f32 %v852
  %v885 = vcvt.s32.f32 %v853
  %v886 = vcvt.s32.f32 %v854
  %v887 = vcvt.s32.f32 %v855
  %v888 = vcvt.s32.f32 %v856
  %v889 = vcvt.s32.f32 %v857
  %v890 = vcvt.s32.f32 %v858
  %v891 = vlaneseq
  %v892 = vand.u32 %v891, 127
  %vm893 = vcmp.eq.s32.totalorder %v376, %v892
  %v894 = vsel %vm893, 1, 0
  %v895 = vcvt.s32.f32 %v894
  %v897 = vsel %vm378, %v895, 0
  %v900 = vsel %vm378, %v859, 0
  %v903 = vsel %vm378, %v860, 0
  %v906 = vsel %vm378, %v861, 0
  %v909 = vsel %vm378, %v862, 0
  %v912 = vsel %vm378, %v863, 0
  %v915 = vsel %vm378, %v864, 0
  %v918 = vsel %vm378, %v865, 0
  %v921 = vsel %vm378, %v866, 0
  %v924 = vsel %vm378, %v867, 0
  %v927 = vsel %vm378, %v868, 0
  %v930 = vsel %vm378, %v869, 0
  %v933 = vsel %vm378, %v870, 0
  %v936 = vsel %vm378, %v871, 0
  %v939 = vsel %vm378, %v872, 0
  %v942 = vsel %vm378, %v873, 0
  %v945 = vsel %vm378, %v874, 0
  %v948 = vsel %vm378, %v875, 0
  %v951 = vsel %vm378, %v876, 0
  %v954 = vsel %vm378, %v877, 0
  %v957 = vsel %vm378, %v878, 0
  %v960 = vsel %vm378, %v879, 0
  %v963 = vsel %vm378, %v880, 0
  %v966 = vsel %vm378, %v881, 0
  %v969 = vsel %vm378, %v882, 0
  %v972 = vsel %vm378, %v883, 0
  %v975 = vsel %vm378, %v884, 0
  %v978 = vsel %vm378, %v885, 0
  %v981 = vsel %vm378, %v886, 0
  %v984 = vsel %vm378, %v887, 0
  %v987 = vsel %vm378, %v888, 0
  %v990 = vsel %vm378, %v889, 0
  %v993 = vsel %vm378, %v890, 0
  %995 = vmatprep.subr.mxu0 0.0
  %996 = vmatpush1.xpose.msra.mxu0 %v945
  %997 = vmatprep.subr.mxu0 0.0
  %998 = vmatpush1.xpose.msra.mxu0 %v942
  %999 = vmatprep.subr.mxu0 0.0
  %1000 = vmatpush1.xpose.msra.mxu0 %v939
  %1001 = vmatprep.subr.mxu0 0.0
  %1002 = vmatpush1.xpose.msra.mxu0 %v936
  %1003 = vmatprep.subr.mxu0 0.0
  %1004 = vmatpush1.xpose.msra.mxu0 %v933
  %1005 = vmatprep.subr.mxu0 0.0
  %1006 = vmatpush1.xpose.msra.mxu0 %v930
  %1007 = vmatprep.subr.mxu0 0.0
  %1008 = vmatpush1.xpose.msra.mxu0 %v927
  %1009 = vmatprep.subr.mxu0 0.0
  %1010 = vmatpush1.xpose.msra.mxu0 %v924
  %1011 = vmatprep.subr.mxu0 0.0
  %1012 = vmatpush1.xpose.msra.mxu0 %v921
  %1013 = vmatprep.subr.mxu0 0.0
  %1014 = vmatpush1.xpose.msra.mxu0 %v918
  %1015 = vmatprep.subr.mxu0 0.0
  %1016 = vmatpush1.xpose.msra.mxu0 %v915
  %1017 = vmatprep.subr.mxu0 0.0
  %1018 = vmatpush1.xpose.msra.mxu0 %v912
  %1019 = vmatprep.subr.mxu0 0.0
  %1020 = vmatpush1.xpose.msra.mxu0 %v909
  %1021 = vmatprep.subr.mxu0 0.0
  %1022 = vmatpush1.xpose.msra.mxu0 %v906
  %1023 = vmatprep.subr.mxu0 0.0
  %1024 = vmatpush1.xpose.msra.mxu0 %v903
  %1025 = vmatprep.subr.mxu0 0.0
  %1026 = vmatpush1.xpose.msra.mxu0 %v900
  %1027 = vmatprep.subr.mxu0 0.0
  %1028 = vmatpush2.xpose.msra.mxu0 %v993
  %1029 = vmatprep.subr.mxu0 0.0
  %1030 = vmatpush2.xpose.msra.mxu0 %v990
  %1031 = vmatprep.subr.mxu0 0.0
  %1032 = vmatpush2.xpose.msra.mxu0 %v987
  %1033 = vmatprep.subr.mxu0 0.0
  %1034 = vmatpush2.xpose.msra.mxu0 %v984
  %1035 = vmatprep.subr.mxu0 0.0
  %1036 = vmatpush2.xpose.msra.mxu0 %v981
  %1037 = vmatprep.subr.mxu0 0.0
  %1038 = vmatpush2.xpose.msra.mxu0 %v978
  %1039 = vmatprep.subr.mxu0 0.0
  %1040 = vmatpush2.xpose.msra.mxu0 %v975
  %1041 = vmatprep.subr.mxu0 0.0
  %1042 = vmatpush2.xpose.msra.mxu0 %v972
  %1043 = vmatprep.subr.mxu0 0.0
  %1044 = vmatpush2.xpose.msra.mxu0 %v969
  %1045 = vmatprep.subr.mxu0 0.0
  %1046 = vmatpush2.xpose.msra.mxu0 %v966
  %1047 = vmatprep.subr.mxu0 0.0
  %1048 = vmatpush2.xpose.msra.mxu0 %v963
  %1049 = vmatprep.subr.mxu0 0.0
  %1050 = vmatpush2.xpose.msra.mxu0 %v960
  %1051 = vmatprep.subr.mxu0 0.0
  %1052 = vmatpush2.xpose.msra.mxu0 %v957
  %1053 = vmatprep.subr.mxu0 0.0
  %1054 = vmatpush2.xpose.msra.mxu0 %v954
  %1055 = vmatprep.subr.mxu0 0.0
  %1056 = vmatpush2.xpose.msra.mxu0 %v951
  %1057 = vmatprep.subr.mxu0 0.0
  %1058 = vmatpush2.xpose.msra.mxu0 %v948
  %1059 = vmatprep.mubr.f32.mxu0 0.0
  %1060 = vmatmul.mubr.f32.gmra.mxu0 %v897
  %v1061 = vpop.f32.mrf.mxu0
  %v1062 = vadd.f32 0.0, %v1061
  %v1063 = vpop.f32.mrf.mxu0
  %v1064 = vadd.f32 0.0, %v1063
  %1065 = vmatprep.mubr.f32.mxu0 0.0
  %1066 = vmatmul.mubr.f32.gmra.mxu0 %v897
  %v1067 = vpop.f32.mrf.mxu0
  %v1068 = vadd.f32 0.0, %v1067
  %v1069 = vpop.f32.mrf.mxu0
  %v1070 = vadd.f32 0.0, %v1069
  %1071 = vmatprep.mubr.f32.mxu0 0.0
  %1072 = vmatmul.mubr.f32.gmra.mxu0 %v897
  %v1073 = vpop.f32.mrf.mxu0
  %v1074 = vadd.f32 0.0, %v1073
  %v1075 = vpop.f32.mrf.mxu0
  %v1076 = vadd.f32 0.0, %v1075
  %1077 = vmatprep.mubr.f32.mxu0 0.0
  %1078 = vmatmul.mubr.f32.gmra.mxu0 %v897
  %v1079 = vpop.f32.mrf.mxu0
  %v1080 = vadd.f32 0.0, %v1079
  %v1081 = vpop.f32.mrf.mxu0
  %v1082 = vadd.f32 0.0, %v1081
  %1083 = vmatprep.mubr.f32.mxu0 0.0
  %1084 = vmatmul.mubr.f32.gmra.mxu0 %v897
  %v1085 = vpop.f32.mrf.mxu0
  %v1086 = vadd.f32 0.0, %v1085
  %v1087 = vpop.f32.mrf.mxu0
  %v1088 = vadd.f32 0.0, %v1087
  %1089 = vmatprep.mubr.f32.mxu0 0.0
  %1090 = vmatmul.mubr.f32.gmra.mxu0 %v897
  %v1091 = vpop.f32.mrf.mxu0
  %v1092 = vadd.f32 0.0, %v1091
  %v1093 = vpop.f32.mrf.mxu0
  %v1094 = vadd.f32 0.0, %v1093
  %1095 = vmatprep.mubr.f32.mxu0 0.0
  %1096 = vmatmul.mubr.f32.gmra.mxu0 %v897
  %v1097 = vpop.f32.mrf.mxu0
  %v1098 = vadd.f32 0.0, %v1097
  %v1099 = vpop.f32.mrf.mxu0
  %v1100 = vadd.f32 0.0, %v1099
  %1101 = vmatprep.mubr.f32.mxu0 0.0
  %1102 = vmatmul.mubr.f32.gmra.mxu0 %v897
  %v1103 = vpop.f32.mrf.mxu0
  %v1104 = vadd.f32 0.0, %v1103
  %v1105 = vpop.f32.mrf.mxu0
  %v1106 = vadd.f32 0.0, %v1105
  %1107 = vmatprep.mubr.f32.mxu0 0.0
  %1108 = vmatmul.mubr.f32.gmra.mxu0 %v897
  %v1109 = vpop.f32.mrf.mxu0
  %v1110 = vadd.f32 0.0, %v1109
  %v1111 = vpop.f32.mrf.mxu0
  %v1112 = vadd.f32 0.0, %v1111
  %1113 = vmatprep.mubr.f32.mxu0 0.0
  %1114 = vmatmul.mubr.f32.gmra.mxu0 %v897
  %v1115 = vpop.f32.mrf.mxu0
  %v1116 = vadd.f32 0.0, %v1115
  %v1117 = vpop.f32.mrf.mxu0
  %v1118 = vadd.f32 0.0, %v1117
  %1119 = vmatprep.mubr.f32.mxu0 0.0
  %1120 = vmatmul.mubr.f32.gmra.mxu0 %v897
  %v1121 = vpop.f32.mrf.mxu0
  %v1122 = vadd.f32 0.0, %v1121
  %v1123 = vpop.f32.mrf.mxu0
  %v1124 = vadd.f32 0.0, %v1123
  %1125 = vmatprep.mubr.f32.mxu0 0.0
  %1126 = vmatmul.mubr.f32.gmra.mxu0 %v897
  %v1127 = vpop.f32.mrf.mxu0
  %v1128 = vadd.f32 0.0, %v1127
  %v1129 = vpop.f32.mrf.mxu0
  %v1130 = vadd.f32 0.0, %v1129
  %1131 = vmatprep.mubr.f32.mxu0 0.0
  %1132 = vmatmul.mubr.f32.gmra.mxu0 %v897
  %v1133 = vpop.f32.mrf.mxu0
  %v1134 = vadd.f32 0.0, %v1133
  %v1135 = vpop.f32.mrf.mxu0
  %v1136 = vadd.f32 0.0, %v1135
  %1137 = vmatprep.mubr.f32.mxu0 0.0
  %1138 = vmatmul.mubr.f32.gmra.mxu0 %v897
  %v1139 = vpop.f32.mrf.mxu0
  %v1140 = vadd.f32 0.0, %v1139
  %v1141 = vpop.f32.mrf.mxu0
  %v1142 = vadd.f32 0.0, %v1141
  %1143 = vmatprep.mubr.f32.mxu0 0.0
  %1144 = vmatmul.mubr.f32.gmra.mxu0 %v897
  %v1145 = vpop.f32.mrf.mxu0
  %v1146 = vadd.f32 0.0, %v1145
  %v1147 = vpop.f32.mrf.mxu0
  %v1148 = vadd.f32 0.0, %v1147
  %1149 = vmatprep.mubr.f32.mxu0 0.0
  %1150 = vmatmul.mubr.f32.gmra.mxu0 %v897
  %v1151 = vpop.f32.mrf.mxu0
  %v1152 = vadd.f32 0.0, %v1151
  %v1153 = vpop.f32.mrf.mxu0
  %v1154 = vadd.f32 0.0, %v1153
  %1155 = vdwg.mxu0
  %v1156 = vadd.s32 %v892, 128
  %vm1157 = vcmp.ge.s32.totalorder %v892, 0
  %vm1158 = vcmp.ge.s32.totalorder %v1156, 0
  %vm1159 = vcmp.ge.s32.totalorder %v892, 16
  %vm1160 = vcmp.ge.s32.totalorder %v1156, 16
  %vm1161 = vcmp.ge.s32.totalorder %v892, 32
  %vm1162 = vcmp.ge.s32.totalorder %v1156, 32
  %vm1163 = vcmp.ge.s32.totalorder %v892, 48
  %vm1164 = vcmp.ge.s32.totalorder %v1156, 48
  %vm1165 = vcmp.ge.s32.totalorder %v892, 64
  %vm1166 = vcmp.ge.s32.totalorder %v1156, 64
  %vm1167 = vcmp.ge.s32.totalorder %v892, 80
  %vm1168 = vcmp.ge.s32.totalorder %v1156, 80
  %vm1169 = vcmp.ge.s32.totalorder %v892, 96
  %vm1170 = vcmp.ge.s32.totalorder %v1156, 96
  %vm1171 = vcmp.ge.s32.totalorder %v892, 112
  %vm1172 = vcmp.ge.s32.totalorder %v1156, 112
  %vm1173 = vcmp.ge.s32.totalorder %v892, 128
  %vm1174 = vcmp.ge.s32.totalorder %v1156, 128
  %vm1175 = vcmp.ge.s32.totalorder %v892, 144
  %vm1176 = vcmp.ge.s32.totalorder %v1156, 144
  %vm1177 = vcmp.ge.s32.totalorder %v892, 160
  %vm1178 = vcmp.ge.s32.totalorder %v1156, 160
  %vm1179 = vcmp.ge.s32.totalorder %v892, 176
  %vm1180 = vcmp.ge.s32.totalorder %v1156, 176
  %vm1181 = vcmp.ge.s32.totalorder %v892, 192
  %vm1182 = vcmp.ge.s32.totalorder %v1156, 192
  %vm1183 = vcmp.ge.s32.totalorder %v892, 208
  %vm1184 = vcmp.ge.s32.totalorder %v1156, 208
  %vm1185 = vcmp.ge.s32.totalorder %v892, 224
  %vm1186 = vcmp.ge.s32.totalorder %v1156, 224
  %vm1187 = vcmp.ge.s32.totalorder %v892, 240
  %vm1188 = vcmp.ge.s32.totalorder %v1156, 240
  %vm1189 = vcmp.lt.s32.totalorder %v892, 16
  %vm1190 = vcmp.lt.s32.totalorder %v1156, 16
  %vm1191 = vcmp.lt.s32.totalorder %v892, 32
  %vm1192 = vcmp.lt.s32.totalorder %v1156, 32
  %vm1193 = vcmp.lt.s32.totalorder %v892, 48
  %vm1194 = vcmp.lt.s32.totalorder %v1156, 48
  %vm1195 = vcmp.lt.s32.totalorder %v892, 64
  %vm1196 = vcmp.lt.s32.totalorder %v1156, 64
  %vm1197 = vcmp.lt.s32.totalorder %v892, 80
  %vm1198 = vcmp.lt.s32.totalorder %v1156, 80
  %vm1199 = vcmp.lt.s32.totalorder %v892, 96
  %vm1200 = vcmp.lt.s32.totalorder %v1156, 96
  %vm1201 = vcmp.lt.s32.totalorder %v892, 112
  %vm1202 = vcmp.lt.s32.totalorder %v1156, 112
  %vm1203 = vcmp.lt.s32.totalorder %v892, 128
  %vm1204 = vcmp.lt.s32.totalorder %v1156, 128
  %vm1205 = vcmp.lt.s32.totalorder %v892, 144
  %vm1206 = vcmp.lt.s32.totalorder %v1156, 144
  %vm1207 = vcmp.lt.s32.totalorder %v892, 160
  %vm1208 = vcmp.lt.s32.totalorder %v1156, 160
  %vm1209 = vcmp.lt.s32.totalorder %v892, 176
  %vm1210 = vcmp.lt.s32.totalorder %v1156, 176
  %vm1211 = vcmp.lt.s32.totalorder %v892, 192
  %vm1212 = vcmp.lt.s32.totalorder %v1156, 192
  %vm1213 = vcmp.lt.s32.totalorder %v892, 208
  %vm1214 = vcmp.lt.s32.totalorder %v1156, 208
  %vm1215 = vcmp.lt.s32.totalorder %v892, 224
  %vm1216 = vcmp.lt.s32.totalorder %v1156, 224
  %vm1217 = vcmp.lt.s32.totalorder %v892, 240
  %vm1218 = vcmp.lt.s32.totalorder %v1156, 240
  %vm1219 = vcmp.lt.s32.totalorder %v892, 256
  %vm1220 = vcmp.lt.s32.totalorder %v1156, 256
  %vm1221 = vmand %vm1157, %vm1189
  %vm1222 = vmand %vm1158, %vm1190
  %vm1223 = vmand %vm1159, %vm1191
  %vm1224 = vmand %vm1160, %vm1192
  %vm1225 = vmand %vm1161, %vm1193
  %vm1226 = vmand %vm1162, %vm1194
  %vm1227 = vmand %vm1163, %vm1195
  %vm1228 = vmand %vm1164, %vm1196
  %vm1229 = vmand %vm1165, %vm1197
  %vm1230 = vmand %vm1166, %vm1198
  %vm1231 = vmand %vm1167, %vm1199
  %vm1232 = vmand %vm1168, %vm1200
  %vm1233 = vmand %vm1169, %vm1201
  %vm1234 = vmand %vm1170, %vm1202
  %vm1235 = vmand %vm1171, %vm1203
  %vm1236 = vmand %vm1172, %vm1204
  %vm1237 = vmand %vm1173, %vm1205
  %vm1238 = vmand %vm1174, %vm1206
  %vm1239 = vmand %vm1175, %vm1207
  %vm1240 = vmand %vm1176, %vm1208
  %vm1241 = vmand %vm1177, %vm1209
  %vm1242 = vmand %vm1178, %vm1210
  %vm1243 = vmand %vm1179, %vm1211
  %vm1244 = vmand %vm1180, %vm1212
  %vm1245 = vmand %vm1181, %vm1213
  %vm1246 = vmand %vm1182, %vm1214
  %vm1247 = vmand %vm1183, %vm1215
  %vm1248 = vmand %vm1184, %vm1216
  %vm1249 = vmand %vm1185, %vm1217
  %vm1250 = vmand %vm1186, %vm1218
  %vm1251 = vmand %vm1187, %vm1219
  %vm1252 = vmand %vm1188, %vm1220
  %v1253 = vsel %vm1221, 1, 0
  %v1254 = vsel %vm1222, 1, 0
  %v1255 = vsel %vm1223, 1, 0
  %v1256 = vsel %vm1224, 1, 0
  %v1257 = vsel %vm1225, 1, 0
  %v1258 = vsel %vm1226, 1, 0
  %v1259 = vsel %vm1227, 1, 0
  %v1260 = vsel %vm1228, 1, 0
  %v1261 = vsel %vm1229, 1, 0
  %v1262 = vsel %vm1230, 1, 0
  %v1263 = vsel %vm1231, 1, 0
  %v1264 = vsel %vm1232, 1, 0
  %v1265 = vsel %vm1233, 1, 0
  %v1266 = vsel %vm1234, 1, 0
  %v1267 = vsel %vm1235, 1, 0
  %v1268 = vsel %vm1236, 1, 0
  %v1269 = vsel %vm1237, 1, 0
  %v1270 = vsel %vm1238, 1, 0
  %v1271 = vsel %vm1239, 1, 0
  %v1272 = vsel %vm1240, 1, 0
  %v1273 = vsel %vm1241, 1, 0
  %v1274 = vsel %vm1242, 1, 0
  %v1275 = vsel %vm1243, 1, 0
  %v1276 = vsel %vm1244, 1, 0
  %v1277 = vsel %vm1245, 1, 0
  %v1278 = vsel %vm1246, 1, 0
  %v1279 = vsel %vm1247, 1, 0
  %v1280 = vsel %vm1248, 1, 0
  %v1281 = vsel %vm1249, 1, 0
  %v1282 = vsel %vm1250, 1, 0
  %v1283 = vsel %vm1251, 1, 0
  %v1284 = vsel %vm1252, 1, 0
  %v1285 = vcvt.s32.f32 %v1253
  %v1286 = vcvt.s32.f32 %v1254
  %v1287 = vcvt.s32.f32 %v1255
  %v1288 = vcvt.s32.f32 %v1256
  %v1289 = vcvt.s32.f32 %v1257
  %v1290 = vcvt.s32.f32 %v1258
  %v1291 = vcvt.s32.f32 %v1259
  %v1292 = vcvt.s32.f32 %v1260
  %v1293 = vcvt.s32.f32 %v1261
  %v1294 = vcvt.s32.f32 %v1262
  %v1295 = vcvt.s32.f32 %v1263
  %v1296 = vcvt.s32.f32 %v1264
  %v1297 = vcvt.s32.f32 %v1265
  %v1298 = vcvt.s32.f32 %v1266
  %v1299 = vcvt.s32.f32 %v1267
  %v1300 = vcvt.s32.f32 %v1268
  %v1301 = vcvt.s32.f32 %v1269
  %v1302 = vcvt.s32.f32 %v1270
  %v1303 = vcvt.s32.f32 %v1271
  %v1304 = vcvt.s32.f32 %v1272
  %v1305 = vcvt.s32.f32 %v1273
  %v1306 = vcvt.s32.f32 %v1274
  %v1307 = vcvt.s32.f32 %v1275
  %v1308 = vcvt.s32.f32 %v1276
  %v1309 = vcvt.s32.f32 %v1277
  %v1310 = vcvt.s32.f32 %v1278
  %v1311 = vcvt.s32.f32 %v1279
  %v1312 = vcvt.s32.f32 %v1280
  %v1313 = vcvt.s32.f32 %v1281
  %v1314 = vcvt.s32.f32 %v1282
  %v1315 = vcvt.s32.f32 %v1283
  %v1316 = vcvt.s32.f32 %v1284
  %v1317 = vmul.f32 %v1062, %v1285
  %v1318 = vmul.f32 %v1064, %v1286
  %v1319 = vmul.f32 %v1068, %v1287
  %v1320 = vmul.f32 %v1070, %v1288
  %v1321 = vmul.f32 %v1074, %v1289
  %v1322 = vmul.f32 %v1076, %v1290
  %v1323 = vmul.f32 %v1080, %v1291
  %v1324 = vmul.f32 %v1082, %v1292
  %v1325 = vmul.f32 %v1086, %v1293
  %v1326 = vmul.f32 %v1088, %v1294
  %v1327 = vmul.f32 %v1092, %v1295
  %v1328 = vmul.f32 %v1094, %v1296
  %v1329 = vmul.f32 %v1098, %v1297
  %v1330 = vmul.f32 %v1100, %v1298
  %v1331 = vmul.f32 %v1104, %v1299
  %v1332 = vmul.f32 %v1106, %v1300
  %v1333 = vmul.f32 %v1110, %v1301
  %v1334 = vmul.f32 %v1112, %v1302
  %v1335 = vmul.f32 %v1116, %v1303
  %v1336 = vmul.f32 %v1118, %v1304
  %v1337 = vmul.f32 %v1122, %v1305
  %v1338 = vmul.f32 %v1124, %v1306
  %v1339 = vmul.f32 %v1128, %v1307
  %v1340 = vmul.f32 %v1130, %v1308
  %v1341 = vmul.f32 %v1134, %v1309
  %v1342 = vmul.f32 %v1136, %v1310
  %v1343 = vmul.f32 %v1140, %v1311
  %v1344 = vmul.f32 %v1142, %v1312
  %v1345 = vmul.f32 %v1146, %v1313
  %v1346 = vmul.f32 %v1148, %v1314
  %v1347 = vmul.f32 %v1152, %v1315
  %v1348 = vmul.f32 %v1154, %v1316
  %1349 = vmatprep.subr.mxu0 0.0
  %1350 = vmatpush1.msra.mxu0 %v32
  %1351 = vmatprep.subr.mxu0 0.0
  %1352 = vmatpush1.msra.mxu0 %v31
  %1353 = vmatprep.subr.mxu0 0.0
  %1354 = vmatpush1.msra.mxu0 %v30
  %1355 = vmatprep.subr.mxu0 0.0
  %1356 = vmatpush1.msra.mxu0 %v29
  %1357 = vmatprep.subr.mxu0 0.0
  %1358 = vmatpush1.msra.mxu0 %v28
  %1359 = vmatprep.subr.mxu0 0.0
  %1360 = vmatpush1.msra.mxu0 %v27
  %1361 = vmatprep.subr.mxu0 0.0
  %1362 = vmatpush1.msra.mxu0 %v26
  %1363 = vmatprep.subr.mxu0 0.0
  %1364 = vmatpush1.msra.mxu0 %v25
  %1365 = vmatprep.subr.mxu0 0.0
  %1366 = vmatpush1.msra.mxu0 %v24
  %1367 = vmatprep.subr.mxu0 0.0
  %1368 = vmatpush1.msra.mxu0 %v23
  %1369 = vmatprep.subr.mxu0 0.0
  %1370 = vmatpush1.msra.mxu0 %v22
  %1371 = vmatprep.subr.mxu0 0.0
  %1372 = vmatpush1.msra.mxu0 %v21
  %1373 = vmatprep.subr.mxu0 0.0
  %1374 = vmatpush1.msra.mxu0 %v20
  %1375 = vmatprep.subr.mxu0 0.0
  %1376 = vmatpush1.msra.mxu0 %v19
  %1377 = vmatprep.subr.mxu0 0.0
  %1378 = vmatpush1.msra.mxu0 %v18
  %1379 = vmatprep.subr.mxu0 0.0
  %1380 = vmatpush1.msra.mxu0 %v17
  %1381 = vmatprep.subr.mxu0 0.0
  %1382 = vmatpush2.msra.mxu0 %v48
  %1383 = vmatprep.subr.mxu0 0.0
  %1384 = vmatpush2.msra.mxu0 %v47
  %1385 = vmatprep.subr.mxu0 0.0
  %1386 = vmatpush2.msra.mxu0 %v46
  %1387 = vmatprep.subr.mxu0 0.0
  %1388 = vmatpush2.msra.mxu0 %v45
  %1389 = vmatprep.subr.mxu0 0.0
  %1390 = vmatpush2.msra.mxu0 %v44
  %1391 = vmatprep.subr.mxu0 0.0
  %1392 = vmatpush2.msra.mxu0 %v43
  %1393 = vmatprep.subr.mxu0 0.0
  %1394 = vmatpush2.msra.mxu0 %v42
  %1395 = vmatprep.subr.mxu0 0.0
  %1396 = vmatpush2.msra.mxu0 %v41
  %1397 = vmatprep.subr.mxu0 0.0
  %1398 = vmatpush2.msra.mxu0 %v40
  %1399 = vmatprep.subr.mxu0 0.0
  %1400 = vmatpush2.msra.mxu0 %v39
  %1401 = vmatprep.subr.mxu0 0.0
  %1402 = vmatpush2.msra.mxu0 %v38
  %1403 = vmatprep.subr.mxu0 0.0
  %1404 = vmatpush2.msra.mxu0 %v37
  %1405 = vmatprep.subr.mxu0 0.0
  %1406 = vmatpush2.msra.mxu0 %v36
  %1407 = vmatprep.subr.mxu0 0.0
  %1408 = vmatpush2.msra.mxu0 %v35
  %1409 = vmatprep.subr.mxu0 0.0
  %1410 = vmatpush2.msra.mxu0 %v34
  %1411 = vmatprep.subr.mxu0 0.0
  %1412 = vmatpush2.msra.mxu0 %v33
  %1413 = vmatprep.mubr.f32.mxu0 %v1318
  %1414 = vmatmul.mubr.f32.gmra.mxu0 %v1317
  %v1415 = vpop.f32.mrf.mxu0
  %v1416 = vadd.f32 0.0, %v1415
  %v1417 = vpop.f32.mrf.mxu0
  %1418 = vmatprep.mubr.f32.mxu0 %v1320
  %1419 = vmatmul.mubr.f32.gmra.mxu0 %v1319
  %v1420 = vpop.f32.mrf.mxu0
  %v1421 = vadd.f32 0.0, %v1420
  %v1422 = vpop.f32.mrf.mxu0
  %1423 = vmatprep.mubr.f32.mxu0 %v1322
  %1424 = vmatmul.mubr.f32.gmra.mxu0 %v1321
  %v1425 = vpop.f32.mrf.mxu0
  %v1426 = vadd.f32 0.0, %v1425
  %v1427 = vpop.f32.mrf.mxu0
  %1428 = vmatprep.mubr.f32.mxu0 %v1324
  %1429 = vmatmul.mubr.f32.gmra.mxu0 %v1323
  %v1430 = vpop.f32.mrf.mxu0
  %v1431 = vadd.f32 0.0, %v1430
  %v1432 = vpop.f32.mrf.mxu0
  %1433 = vmatprep.mubr.f32.mxu0 %v1326
  %1434 = vmatmul.mubr.f32.gmra.mxu0 %v1325
  %v1435 = vpop.f32.mrf.mxu0
  %v1436 = vadd.f32 0.0, %v1435
  %v1437 = vpop.f32.mrf.mxu0
  %1438 = vmatprep.mubr.f32.mxu0 %v1328
  %1439 = vmatmul.mubr.f32.gmra.mxu0 %v1327
  %v1440 = vpop.f32.mrf.mxu0
  %v1441 = vadd.f32 0.0, %v1440
  %v1442 = vpop.f32.mrf.mxu0
  %1443 = vmatprep.mubr.f32.mxu0 %v1330
  %1444 = vmatmul.mubr.f32.gmra.mxu0 %v1329
  %v1445 = vpop.f32.mrf.mxu0
  %v1446 = vadd.f32 0.0, %v1445
  %v1447 = vpop.f32.mrf.mxu0
  %1448 = vmatprep.mubr.f32.mxu0 %v1332
  %1449 = vmatmul.mubr.f32.gmra.mxu0 %v1331
  %v1450 = vpop.f32.mrf.mxu0
  %v1451 = vadd.f32 0.0, %v1450
  %v1452 = vpop.f32.mrf.mxu0
  %1453 = vmatprep.mubr.f32.mxu0 %v1334
  %1454 = vmatmul.mubr.f32.gmra.mxu0 %v1333
  %v1455 = vpop.f32.mrf.mxu0
  %v1456 = vadd.f32 0.0, %v1455
  %v1457 = vpop.f32.mrf.mxu0
  %1458 = vmatprep.mubr.f32.mxu0 %v1336
  %1459 = vmatmul.mubr.f32.gmra.mxu0 %v1335
  %v1460 = vpop.f32.mrf.mxu0
  %v1461 = vadd.f32 0.0, %v1460
  %v1462 = vpop.f32.mrf.mxu0
  %1463 = vmatprep.mubr.f32.mxu0 %v1338
  %1464 = vmatmul.mubr.f32.gmra.mxu0 %v1337
  %v1465 = vpop.f32.mrf.mxu0
  %v1466 = vadd.f32 0.0, %v1465
  %v1467 = vpop.f32.mrf.mxu0
  %1468 = vmatprep.mubr.f32.mxu0 %v1340
  %1469 = vmatmul.mubr.f32.gmra.mxu0 %v1339
  %v1470 = vpop.f32.mrf.mxu0
  %v1471 = vadd.f32 0.0, %v1470
  %v1472 = vpop.f32.mrf.mxu0
  %1473 = vmatprep.mubr.f32.mxu0 %v1342
  %1474 = vmatmul.mubr.f32.gmra.mxu0 %v1341
  %v1475 = vpop.f32.mrf.mxu0
  %v1476 = vadd.f32 0.0, %v1475
  %v1477 = vpop.f32.mrf.mxu0
  %1478 = vmatprep.mubr.f32.mxu0 %v1344
  %1479 = vmatmul.mubr.f32.gmra.mxu0 %v1343
  %v1480 = vpop.f32.mrf.mxu0
  %v1481 = vadd.f32 0.0, %v1480
  %v1482 = vpop.f32.mrf.mxu0
  %1483 = vmatprep.mubr.f32.mxu0 %v1346
  %1484 = vmatmul.mubr.f32.gmra.mxu0 %v1345
  %v1485 = vpop.f32.mrf.mxu0
  %v1486 = vadd.f32 0.0, %v1485
  %v1487 = vpop.f32.mrf.mxu0
  %1488 = vmatprep.mubr.f32.mxu0 %v1348
  %1489 = vmatmul.mubr.f32.gmra.mxu0 %v1347
  %v1490 = vpop.f32.mrf.mxu0
  %v1491 = vadd.f32 0.0, %v1490
  %v1492 = vpop.f32.mrf.mxu0
  %1493 = vdwg.mxu0
  %v1494 = vld [vmem:[%s2] sm:$0xff]
  %v1495 = vld [vmem:[%s2 + $0x8] sm:$0xff]
  %v1496 = vld [vmem:[%s2 + $0x10] sm:$0xff]
  %v1497 = vld [vmem:[%s2 + $0x18] sm:$0xff]
  %v1498 = vld [vmem:[%s3] sm:$0x1]
  %v1500 = vlaneseq
  %v1501 = vshrl.u32 %v1500, 7
  %v1502 = vsub.s32 0, %v1501
  %v1503 = vrot.slane %v1498, %v1502
  %v1506 = vsel %vm53, %v1416, 0
  %v1509 = vsel %vm53, %v1421, 0
  %v1512 = vsel %vm53, %v1426, 0
  %v1515 = vsel %vm53, %v1431, 0
  %v1518 = vsel %vm53, %v1436, 0
  %v1521 = vsel %vm53, %v1441, 0
  %v1524 = vsel %vm53, %v1446, 0
  %v1527 = vsel %vm53, %v1451, 0
  %v1530 = vsel %vm53, %v1456, 0
  %v1533 = vsel %vm53, %v1461, 0
  %v1536 = vsel %vm53, %v1466, 0
  %v1539 = vsel %vm53, %v1471, 0
  %v1542 = vsel %vm53, %v1476, 0
  %v1545 = vsel %vm53, %v1481, 0
  %v1548 = vsel %vm53, %v1486, 0
  %v1551 = vsel %vm53, %v1491, 0
  %1553 = vmatprep.subr.mxu0 0.0
  %1554 = vmatpush1.msra.mxu0 0.0
  %1555 = vmatprep.subr.mxu0 0.0
  %1556 = vmatpush1.msra.mxu0 0.0
  %1557 = vmatprep.subr.mxu0 0.0
  %1558 = vmatpush1.msra.mxu0 0.0
  %1559 = vmatprep.subr.mxu0 0.0
  %1560 = vmatpush1.msra.mxu0 0.0
  %1561 = vmatprep.subr.mxu0 0.0
  %1562 = vmatpush1.msra.mxu0 0.0
  %1563 = vmatprep.subr.mxu0 0.0
  %1564 = vmatpush1.msra.mxu0 0.0
  %1565 = vmatprep.subr.mxu0 0.0
  %1566 = vmatpush1.msra.mxu0 0.0
  %1567 = vmatprep.subr.mxu0 0.0
  %1568 = vmatpush1.msra.mxu0 0.0
  %1569 = vmatprep.subr.mxu0 0.0
  %1570 = vmatpush1.msra.mxu0 0.0
  %1571 = vmatprep.subr.mxu0 0.0
  %1572 = vmatpush1.msra.mxu0 0.0
  %1573 = vmatprep.subr.mxu0 0.0
  %1574 = vmatpush1.msra.mxu0 0.0
  %1575 = vmatprep.subr.mxu0 0.0
  %1576 = vmatpush1.msra.mxu0 0.0
  %1577 = vmatprep.subr.mxu0 0.0
  %1578 = vmatpush1.msra.mxu0 %v1497
  %1579 = vmatprep.subr.mxu0 0.0
  %1580 = vmatpush1.msra.mxu0 %v1496
  %1581 = vmatprep.subr.mxu0 0.0
  %1582 = vmatpush1.msra.mxu0 %v1495
  %1583 = vmatprep.subr.mxu0 0.0
  %1584 = vmatpush1.msra.mxu0 %v1494
  %1585 = vmatprep.subr.mxu0 0.0
  %1586 = vmatpush2.msra.mxu0 0.0
  %1587 = vmatprep.subr.mxu0 0.0
  %1588 = vmatpush2.msra.mxu0 0.0
  %1589 = vmatprep.subr.mxu0 0.0
  %1590 = vmatpush2.msra.mxu0 0.0
  %1591 = vmatprep.subr.mxu0 0.0
  %1592 = vmatpush2.msra.mxu0 0.0
  %1593 = vmatprep.subr.mxu0 0.0
  %1594 = vmatpush2.msra.mxu0 0.0
  %1595 = vmatprep.subr.mxu0 0.0
  %1596 = vmatpush2.msra.mxu0 0.0
  %1597 = vmatprep.subr.mxu0 0.0
  %1598 = vmatpush2.msra.mxu0 0.0
  %1599 = vmatprep.subr.mxu0 0.0
  %1600 = vmatpush2.msra.mxu0 0.0
  %1601 = vmatprep.subr.mxu0 0.0
  %1602 = vmatpush2.msra.mxu0 0.0
  %1603 = vmatprep.subr.mxu0 0.0
  %1604 = vmatpush2.msra.mxu0 0.0
  %1605 = vmatprep.subr.mxu0 0.0
  %1606 = vmatpush2.msra.mxu0 0.0
  %1607 = vmatprep.subr.mxu0 0.0
  %1608 = vmatpush2.msra.mxu0 0.0
  %1609 = vmatprep.subr.mxu0 0.0
  %1610 = vmatpush2.msra.mxu0 0.0
  %1611 = vmatprep.subr.mxu0 0.0
  %1612 = vmatpush2.msra.mxu0 0.0
  %1613 = vmatprep.subr.mxu0 0.0
  %1614 = vmatpush2.msra.mxu0 0.0
  %1615 = vmatprep.subr.mxu0 0.0
  %1616 = vmatpush2.msra.mxu0 0.0
  %1617 = vmatprep.mubr.f32.mxu0 0.0
  %1618 = vmatmul.mubr.f32.gmra.mxu0 %v1506
  %v1619 = vpop.f32.mrf.mxu0
  %v1620 = vadd.f32 %v1503, %v1619
  %v1621 = vpop.f32.mrf.mxu0
  %1622 = vmatprep.mubr.f32.mxu0 0.0
  %1623 = vmatmul.mubr.f32.gmra.mxu0 %v1509
  %v1624 = vpop.f32.mrf.mxu0
  %v1625 = vadd.f32 %v1503, %v1624
  %v1626 = vpop.f32.mrf.mxu0
  %1627 = vmatprep.mubr.f32.mxu0 0.0
  %1628 = vmatmul.mubr.f32.gmra.mxu0 %v1512
  %v1629 = vpop.f32.mrf.mxu0
  %v1630 = vadd.f32 %v1503, %v1629
  %v1631 = vpop.f32.mrf.mxu0
  %1632 = vmatprep.mubr.f32.mxu0 0.0
  %1633 = vmatmul.mubr.f32.gmra.mxu0 %v1515
  %v1634 = vpop.f32.mrf.mxu0
  %v1635 = vadd.f32 %v1503, %v1634
  %v1636 = vpop.f32.mrf.mxu0
  %1637 = vmatprep.mubr.f32.mxu0 0.0
  %1638 = vmatmul.mubr.f32.gmra.mxu0 %v1518
  %v1639 = vpop.f32.mrf.mxu0
  %v1640 = vadd.f32 %v1503, %v1639
  %v1641 = vpop.f32.mrf.mxu0
  %1642 = vmatprep.mubr.f32.mxu0 0.0
  %1643 = vmatmul.mubr.f32.gmra.mxu0 %v1521
  %v1644 = vpop.f32.mrf.mxu0
  %v1645 = vadd.f32 %v1503, %v1644
  %v1646 = vpop.f32.mrf.mxu0
  %1647 = vmatprep.mubr.f32.mxu0 0.0
  %1648 = vmatmul.mubr.f32.gmra.mxu0 %v1524
  %v1649 = vpop.f32.mrf.mxu0
  %v1650 = vadd.f32 %v1503, %v1649
  %v1651 = vpop.f32.mrf.mxu0
  %1652 = vmatprep.mubr.f32.mxu0 0.0
  %1653 = vmatmul.mubr.f32.gmra.mxu0 %v1527
  %v1654 = vpop.f32.mrf.mxu0
  %v1655 = vadd.f32 %v1503, %v1654
  %v1656 = vpop.f32.mrf.mxu0
  %1657 = vmatprep.mubr.f32.mxu0 0.0
  %1658 = vmatmul.mubr.f32.gmra.mxu0 %v1530
  %v1659 = vpop.f32.mrf.mxu0
  %v1660 = vadd.f32 %v1503, %v1659
  %v1661 = vpop.f32.mrf.mxu0
  %1662 = vmatprep.mubr.f32.mxu0 0.0
  %1663 = vmatmul.mubr.f32.gmra.mxu0 %v1533
  %v1664 = vpop.f32.mrf.mxu0
  %v1665 = vadd.f32 %v1503, %v1664
  %v1666 = vpop.f32.mrf.mxu0
  %1667 = vmatprep.mubr.f32.mxu0 0.0
  %1668 = vmatmul.mubr.f32.gmra.mxu0 %v1536
  %v1669 = vpop.f32.mrf.mxu0
  %v1670 = vadd.f32 %v1503, %v1669
  %v1671 = vpop.f32.mrf.mxu0
  %1672 = vmatprep.mubr.f32.mxu0 0.0
  %1673 = vmatmul.mubr.f32.gmra.mxu0 %v1539
  %v1674 = vpop.f32.mrf.mxu0
  %v1675 = vadd.f32 %v1503, %v1674
  %v1676 = vpop.f32.mrf.mxu0
  %1677 = vmatprep.mubr.f32.mxu0 0.0
  %1678 = vmatmul.mubr.f32.gmra.mxu0 %v1542
  %v1679 = vpop.f32.mrf.mxu0
  %v1680 = vadd.f32 %v1503, %v1679
  %v1681 = vpop.f32.mrf.mxu0
  %1682 = vmatprep.mubr.f32.mxu0 0.0
  %1683 = vmatmul.mubr.f32.gmra.mxu0 %v1545
  %v1684 = vpop.f32.mrf.mxu0
  %v1685 = vadd.f32 %v1503, %v1684
  %v1686 = vpop.f32.mrf.mxu0
  %1687 = vmatprep.mubr.f32.mxu0 0.0
  %1688 = vmatmul.mubr.f32.gmra.mxu0 %v1548
  %v1689 = vpop.f32.mrf.mxu0
  %v1690 = vadd.f32 %v1503, %v1689
  %v1691 = vpop.f32.mrf.mxu0
  %1692 = vmatprep.mubr.f32.mxu0 0.0
  %1693 = vmatmul.mubr.f32.gmra.mxu0 %v1551
  %v1694 = vpop.f32.mrf.mxu0
  %v1695 = vadd.f32 %v1503, %v1694
  %v1696 = vpop.f32.mrf.mxu0
  %1697 = vdwg.mxu0
  %v1698 = vmul.f32 %v1620, %v1620
  %v1699 = vmul.f32 %v1625, %v1625
  %v1700 = vmul.f32 %v1630, %v1630
  %v1701 = vmul.f32 %v1635, %v1635
  %v1702 = vmul.f32 %v1640, %v1640
  %v1703 = vmul.f32 %v1645, %v1645
  %v1704 = vmul.f32 %v1650, %v1650
  %v1705 = vmul.f32 %v1655, %v1655
  %v1706 = vmul.f32 %v1660, %v1660
  %v1707 = vmul.f32 %v1665, %v1665
  %v1708 = vmul.f32 %v1670, %v1670
  %v1709 = vmul.f32 %v1675, %v1675
  %v1710 = vmul.f32 %v1680, %v1680
  %v1711 = vmul.f32 %v1685, %v1685
  %v1712 = vmul.f32 %v1690, %v1690
  %v1713 = vmul.f32 %v1695, %v1695
  %v1714 = vsel %vm53, %v1698, 0.0
  %1715 = vadd.xlane.f32.xlu0 %v1714
  %v1716 = vpop.xlane.xlu0 %1715
  %v1717 = vsel %vm53, %v1699, 0.0
  %1718 = vadd.xlane.f32.xlu0 %v1717
  %v1719 = vpop.xlane.xlu0 %1718
  %v1720 = vsel %vm53, %v1700, 0.0
  %1721 = vadd.xlane.f32.xlu0 %v1720
  %v1722 = vpop.xlane.xlu0 %1721
  %v1723 = vsel %vm53, %v1701, 0.0
  %1724 = vadd.xlane.f32.xlu0 %v1723
  %v1725 = vpop.xlane.xlu0 %1724
  %v1726 = vsel %vm53, %v1702, 0.0
  %1727 = vadd.xlane.f32.xlu0 %v1726
  %v1728 = vpop.xlane.xlu0 %1727
  %v1729 = vsel %vm53, %v1703, 0.0
  %1730 = vadd.xlane.f32.xlu0 %v1729
  %v1731 = vpop.xlane.xlu0 %1730
  %v1732 = vsel %vm53, %v1704, 0.0
  %1733 = vadd.xlane.f32.xlu0 %v1732
  %v1734 = vpop.xlane.xlu0 %1733
  %v1735 = vsel %vm53, %v1705, 0.0
  %1736 = vadd.xlane.f32.xlu0 %v1735
  %v1737 = vpop.xlane.xlu0 %1736
  %v1738 = vsel %vm53, %v1706, 0.0
  %1739 = vadd.xlane.f32.xlu0 %v1738
  %v1740 = vpop.xlane.xlu0 %1739
  %v1741 = vsel %vm53, %v1707, 0.0
  %1742 = vadd.xlane.f32.xlu0 %v1741
  %v1743 = vpop.xlane.xlu0 %1742
  %v1744 = vsel %vm53, %v1708, 0.0
  %1745 = vadd.xlane.f32.xlu0 %v1744
  %v1746 = vpop.xlane.xlu0 %1745
  %v1747 = vsel %vm53, %v1709, 0.0
  %1748 = vadd.xlane.f32.xlu0 %v1747
  %v1749 = vpop.xlane.xlu0 %1748
  %v1750 = vsel %vm53, %v1710, 0.0
  %1751 = vadd.xlane.f32.xlu0 %v1750
  %v1752 = vpop.xlane.xlu0 %1751
  %v1753 = vsel %vm53, %v1711, 0.0
  %1754 = vadd.xlane.f32.xlu0 %v1753
  %v1755 = vpop.xlane.xlu0 %1754
  %v1756 = vsel %vm53, %v1712, 0.0
  %1757 = vadd.xlane.f32.xlu0 %v1756
  %v1758 = vpop.xlane.xlu0 %1757
  %v1759 = vsel %vm53, %v1713, 0.0
  %1760 = vadd.xlane.f32.xlu0 %v1759
  %v1761 = vpop.xlane.xlu0 %1760
  %v1762 = vrsqrt.pop %v1716
  %v1763 = vmul.f32 %v1716, %v1762
  %vm1764 = vcmp.eq.f32.partialorder %v1716, inf
  %v1765 = vsel %vm1764, %v1716, %v1763
  %vm1766 = vcmp.eq.f32.partialorder %v1716, 0.0
  %v1767 = vand.u32 %v1716, 2147483648
  %v1768 = vsel %vm1766, %v1767, %v1765
  %v1769 = vrsqrt.pop %v1719
  %v1770 = vmul.f32 %v1719, %v1769
  %vm1771 = vcmp.eq.f32.partialorder %v1719, inf
  %v1772 = vsel %vm1771, %v1719, %v1770
  %vm1773 = vcmp.eq.f32.partialorder %v1719, 0.0
  %v1774 = vand.u32 %v1719, 2147483648
  %v1775 = vsel %vm1773, %v1774, %v1772
  %v1776 = vrsqrt.pop %v1722
  %v1777 = vmul.f32 %v1722, %v1776
  %vm1778 = vcmp.eq.f32.partialorder %v1722, inf
  %v1779 = vsel %vm1778, %v1722, %v1777
  %vm1780 = vcmp.eq.f32.partialorder %v1722, 0.0
  %v1781 = vand.u32 %v1722, 2147483648
  %v1782 = vsel %vm1780, %v1781, %v1779
  %v1783 = vrsqrt.pop %v1725
  %v1784 = vmul.f32 %v1725, %v1783
  %vm1785 = vcmp.eq.f32.partialorder %v1725, inf
  %v1786 = vsel %vm1785, %v1725, %v1784
  %vm1787 = vcmp.eq.f32.partialorder %v1725, 0.0
  %v1788 = vand.u32 %v1725, 2147483648
  %v1789 = vsel %vm1787, %v1788, %v1786
  %v1790 = vrsqrt.pop %v1728
  %v1791 = vmul.f32 %v1728, %v1790
  %vm1792 = vcmp.eq.f32.partialorder %v1728, inf
  %v1793 = vsel %vm1792, %v1728, %v1791
  %vm1794 = vcmp.eq.f32.partialorder %v1728, 0.0
  %v1795 = vand.u32 %v1728, 2147483648
  %v1796 = vsel %vm1794, %v1795, %v1793
  %v1797 = vrsqrt.pop %v1731
  %v1798 = vmul.f32 %v1731, %v1797
  %vm1799 = vcmp.eq.f32.partialorder %v1731, inf
  %v1800 = vsel %vm1799, %v1731, %v1798
  %vm1801 = vcmp.eq.f32.partialorder %v1731, 0.0
  %v1802 = vand.u32 %v1731, 2147483648
  %v1803 = vsel %vm1801, %v1802, %v1800
  %v1804 = vrsqrt.pop %v1734
  %v1805 = vmul.f32 %v1734, %v1804
  %vm1806 = vcmp.eq.f32.partialorder %v1734, inf
  %v1807 = vsel %vm1806, %v1734, %v1805
  %vm1808 = vcmp.eq.f32.partialorder %v1734, 0.0
  %v1809 = vand.u32 %v1734, 2147483648
  %v1810 = vsel %vm1808, %v1809, %v1807
  %v1811 = vrsqrt.pop %v1737
  %v1812 = vmul.f32 %v1737, %v1811
  %vm1813 = vcmp.eq.f32.partialorder %v1737, inf
  %v1814 = vsel %vm1813, %v1737, %v1812
  %vm1815 = vcmp.eq.f32.partialorder %v1737, 0.0
  %v1816 = vand.u32 %v1737, 2147483648
  %v1817 = vsel %vm1815, %v1816, %v1814
  %v1818 = vrsqrt.pop %v1740
  %v1819 = vmul.f32 %v1740, %v1818
  %vm1820 = vcmp.eq.f32.partialorder %v1740, inf
  %v1821 = vsel %vm1820, %v1740, %v1819
  %vm1822 = vcmp.eq.f32.partialorder %v1740, 0.0
  %v1823 = vand.u32 %v1740, 2147483648
  %v1824 = vsel %vm1822, %v1823, %v1821
  %v1825 = vrsqrt.pop %v1743
  %v1826 = vmul.f32 %v1743, %v1825
  %vm1827 = vcmp.eq.f32.partialorder %v1743, inf
  %v1828 = vsel %vm1827, %v1743, %v1826
  %vm1829 = vcmp.eq.f32.partialorder %v1743, 0.0
  %v1830 = vand.u32 %v1743, 2147483648
  %v1831 = vsel %vm1829, %v1830, %v1828
  %v1832 = vrsqrt.pop %v1746
  %v1833 = vmul.f32 %v1746, %v1832
  %vm1834 = vcmp.eq.f32.partialorder %v1746, inf
  %v1835 = vsel %vm1834, %v1746, %v1833
  %vm1836 = vcmp.eq.f32.partialorder %v1746, 0.0
  %v1837 = vand.u32 %v1746, 2147483648
  %v1838 = vsel %vm1836, %v1837, %v1835
  %v1839 = vrsqrt.pop %v1749
  %v1840 = vmul.f32 %v1749, %v1839
  %vm1841 = vcmp.eq.f32.partialorder %v1749, inf
  %v1842 = vsel %vm1841, %v1749, %v1840
  %vm1843 = vcmp.eq.f32.partialorder %v1749, 0.0
  %v1844 = vand.u32 %v1749, 2147483648
  %v1845 = vsel %vm1843, %v1844, %v1842
  %v1846 = vrsqrt.pop %v1752
  %v1847 = vmul.f32 %v1752, %v1846
  %vm1848 = vcmp.eq.f32.partialorder %v1752, inf
  %v1849 = vsel %vm1848, %v1752, %v1847
  %vm1850 = vcmp.eq.f32.partialorder %v1752, 0.0
  %v1851 = vand.u32 %v1752, 2147483648
  %v1852 = vsel %vm1850, %v1851, %v1849
  %v1853 = vrsqrt.pop %v1755
  %v1854 = vmul.f32 %v1755, %v1853
  %vm1855 = vcmp.eq.f32.partialorder %v1755, inf
  %v1856 = vsel %vm1855, %v1755, %v1854
  %vm1857 = vcmp.eq.f32.partialorder %v1755, 0.0
  %v1858 = vand.u32 %v1755, 2147483648
  %v1859 = vsel %vm1857, %v1858, %v1856
  %v1860 = vrsqrt.pop %v1758
  %v1861 = vmul.f32 %v1758, %v1860
  %vm1862 = vcmp.eq.f32.partialorder %v1758, inf
  %v1863 = vsel %vm1862, %v1758, %v1861
  %vm1864 = vcmp.eq.f32.partialorder %v1758, 0.0
  %v1865 = vand.u32 %v1758, 2147483648
  %v1866 = vsel %vm1864, %v1865, %v1863
  %v1867 = vrsqrt.pop %v1761
  %v1868 = vmul.f32 %v1761, %v1867
  %vm1869 = vcmp.eq.f32.partialorder %v1761, inf
  %v1870 = vsel %vm1869, %v1761, %v1868
  %vm1871 = vcmp.eq.f32.partialorder %v1761, 0.0
  %v1872 = vand.u32 %v1761, 2147483648
  %v1873 = vsel %vm1871, %v1872, %v1870
  %v1874 = vadd.f32 %v1768, 1e-08
  %v1875 = vadd.f32 %v1775, 1e-08
  %v1876 = vadd.f32 %v1782, 1e-08
  %v1877 = vadd.f32 %v1789, 1e-08
  %v1878 = vadd.f32 %v1796, 1e-08
  %v1879 = vadd.f32 %v1803, 1e-08
  %v1880 = vadd.f32 %v1810, 1e-08
  %v1881 = vadd.f32 %v1817, 1e-08
  %v1882 = vadd.f32 %v1824, 1e-08
  %v1883 = vadd.f32 %v1831, 1e-08
  %v1884 = vadd.f32 %v1838, 1e-08
  %v1885 = vadd.f32 %v1845, 1e-08
  %v1886 = vadd.f32 %v1852, 1e-08
  %v1887 = vadd.f32 %v1859, 1e-08
  %v1888 = vadd.f32 %v1866, 1e-08
  %v1889 = vadd.f32 %v1873, 1e-08
  %v1890 = vrcp.pop %v1874
  %v1891 = vrcp.pop %v1875
  %v1892 = vrcp.pop %v1876
  %v1893 = vrcp.pop %v1877
  %v1894 = vrcp.pop %v1878
  %v1895 = vrcp.pop %v1879
  %v1896 = vrcp.pop %v1880
  %v1897 = vrcp.pop %v1881
  %v1898 = vrcp.pop %v1882
  %v1899 = vrcp.pop %v1883
  %v1900 = vrcp.pop %v1884
  %v1901 = vrcp.pop %v1885
  %v1902 = vrcp.pop %v1886
  %v1903 = vrcp.pop %v1887
  %v1904 = vrcp.pop %v1888
  %v1905 = vrcp.pop %v1889
  %v1906 = vmul.f32 %v1620, %v1890
  %v1907 = vmul.f32 %v1625, %v1891
  %v1908 = vmul.f32 %v1630, %v1892
  %v1909 = vmul.f32 %v1635, %v1893
  %v1910 = vmul.f32 %v1640, %v1894
  %v1911 = vmul.f32 %v1645, %v1895
  %v1912 = vmul.f32 %v1650, %v1896
  %v1913 = vmul.f32 %v1655, %v1897
  %v1914 = vmul.f32 %v1660, %v1898
  %v1915 = vmul.f32 %v1665, %v1899
  %v1916 = vmul.f32 %v1670, %v1900
  %v1917 = vmul.f32 %v1675, %v1901
  %v1918 = vmul.f32 %v1680, %v1902
  %v1919 = vmul.f32 %v1685, %v1903
  %v1920 = vmul.f32 %v1690, %v1904
  %v1921 = vmul.f32 %v1695, %v1905
  %1922 = vst.msk [vmem:[%s4] sm:$0xff] %vm53, %v1906
  %1923 = vst.msk [vmem:[%s4 + $0x8] sm:$0xff] %vm53, %v1907
  %1924 = vst.msk [vmem:[%s4 + $0x10] sm:$0xff] %vm53, %v1908
  %1925 = vst.msk [vmem:[%s4 + $0x18] sm:$0xff] %vm53, %v1909
  %1926 = vst.msk [vmem:[%s4 + $0x20] sm:$0xff] %vm53, %v1910
  %1927 = vst.msk [vmem:[%s4 + $0x28] sm:$0xff] %vm53, %v1911
  %1928 = vst.msk [vmem:[%s4 + $0x30] sm:$0xff] %vm53, %v1912
  %1929 = vst.msk [vmem:[%s4 + $0x38] sm:$0xff] %vm53, %v1913
  %1930 = vst.msk [vmem:[%s4 + $0x40] sm:$0xff] %vm53, %v1914
  %1931 = vst.msk [vmem:[%s4 + $0x48] sm:$0xff] %vm53, %v1915
  %1932 = vst.msk [vmem:[%s4 + $0x50] sm:$0xff] %vm53, %v1916
  %1933 = vst.msk [vmem:[%s4 + $0x58] sm:$0xff] %vm53, %v1917
  %1934 = vst.msk [vmem:[%s4 + $0x60] sm:$0xff] %vm53, %v1918
  %1935 = vst.msk [vmem:[%s4 + $0x68] sm:$0xff] %vm53, %v1919
  %1936 = vst.msk [vmem:[%s4 + $0x70] sm:$0xff] %vm53, %v1920
  %1937 = vst.msk [vmem:[%s4 + $0x78] sm:$0xff] %vm53, %v1921
  // Predicated region
  $region18: #{tpu_custom_call.1} parent=0 // pred_check
    _
  $region19: #{tpu_custom_call.1} parent=0 // pred_check_branch
    %1939 = sbr.rel (0) target = $region21
  $region20: #{tpu_custom_call.1} parent=0 // pred_region
    _
  $region21: #{tpu_custom_call.1} parent=0 // pred_fallthru
    _
  // Predicated region
  $region22: #{tpu_custom_call.1} parent=0 // pred_check
    _
  $region23: #{tpu_custom_call.1} parent=0 // pred_check_branch
    %1941 = sbr.rel (0) target = $region25
  $region24: #{tpu_custom_call.1} parent=0 // pred_region
    _
  $region25: #{tpu_custom_call.1} parent=0 // pred_fallthru
    _

</llo_original>
